<compile_context>
chip_gen: v5e
topology: v5e:2x2
jax: 0.10.0
libtpu: 0.0.40
codegen_flags: <defaults>
</compile_context>

<pallas_src>
import numpy as np
import jax
import jax.numpy as jnp
from jax.experimental import pallas as pl
from jax.experimental.pallas import tpu as pltpu

EPS = 1e-5


def _round_up(x, m):
    return ((x + m - 1) // m) * m


def evalue_kernel(xin_ref,
                  w1_ref, b1_ref, g1_ref, be1_ref,
                  w2_ref, b2_ref, g2_ref, be2_ref,
                  w3_ref, b3_ref, w4_ref, b4_ref,
                  w5a_ref, w5d_ref, b5_ref,
                  out_ref):
    f32 = jnp.float32
    bf16 = jnp.bfloat16

    x16 = xin_ref[...].astype(bf16)                       # (tb, 16): grid lanes 0:9, direction lanes 9:11

    # Conv2d(1, 100, 2) over the 3x3 grid, im2col folded into w1 host-side:
    # (tb,16) @ (16, 4*128) -> (tb, 512); lane block p = h*2+w holds the 100 channels
    # (pad lanes are exactly 0: zero weight cols + zero bias).
    z1 = jnp.dot(x16, w1_ref[...], preferred_element_type=f32) + b1_ref[...]

    # BatchNorm1d training-mode stats + ReLU over the logical (unpadded) elements.
    # Centered variance with an exact scalar correction for the zero pad lanes
    # (pad lanes of z contribute (0-m)^2 = m^2 each -> subtract n_pad*m^2).
    def bn_relu(z, g, be, n, n_pad):
        m = jnp.sum(z, axis=-1, keepdims=True) * (1.0 / n)
        c = z - m
        q = jnp.sum(c * c, axis=-1, keepdims=True)
        v = jnp.maximum((q - n_pad * (m * m)) * (1.0 / n), 0.0)
        r = jax.lax.rsqrt(v + EPS)
        return jnp.maximum(c * (r * g) + be, 0.0)

    # BatchNorm1d(2): PyTorch sees conv1 output (100,2,2) as (N=100, C=2, L=2) ->
    # stats per h-row over 200 elements.  h=0 -> lanes [0,256), h=1 -> lanes [256,512);
    # each half has 56 zero pad lanes (2 positions x 28 padded channels).
    a1_lo = bn_relu(z1[:, 0:256],   g1_ref[:, 0:256],   be1_ref[:, 0:256],   200.0, 56.0)
    a1_hi = bn_relu(z1[:, 256:512], g1_ref[:, 256:512], be1_ref[:, 256:512], 200.0, 56.0)
    # (Pad lanes of a1_* are nonzero after the BN shift, but the matching w2 rows are zero.)

    # Conv2d(100, 50, 2) on the (100,2,2) activation == split K=256+256 contraction.
    z2 = (jnp.dot(a1_lo.astype(bf16), w2_ref[0:256, :],   preferred_element_type=f32)
          + jnp.dot(a1_hi.astype(bf16), w2_ref[256:512, :], preferred_element_type=f32)
          + b2_ref[...])                                   # (tb, 128), lanes 50:128 exactly 0

    # BatchNorm1d(1): conv2 output (50,1,1) -> stats over 50 logical lanes (78 pad lanes).
    a2 = bn_relu(z2, g2_ref[...], be2_ref[...], 50.0, 78.0)

    # Flatten -> Linear(50,128) -> ReLU (w3 rows 50:128 are zero).
    a3 = jnp.maximum(jnp.dot(a2.astype(bf16), w3_ref[...], preferred_element_type=f32)
                     + b3_ref[...], 0.0)
    # Linear(128,4) -> ReLU; lanes 4:128 are exactly 0.
    a4 = jnp.maximum(jnp.dot(a3.astype(bf16), w4_ref[...], preferred_element_type=f32)
                     + b4_ref[...], 0.0)

    # direction_net: Linear(6,4) on concat([evalue_out, direction]) ==
    #   a4 @ w5a (evalue rows 0:4) + xin @ w5d (direction rows 9:11) + b5.
    z5 = (jnp.dot(a4.astype(bf16), w5a_ref[...], preferred_element_type=f32)
          + jnp.dot(x16, w5d_ref[...], preferred_element_type=f32)
          + b5_ref[...])
    out_ref[...] = jnp.maximum(z5, 0.0)                    # (tb, 128), lanes 4:128 exactly 0


def evalue_network_forward(grids, directions, kp, *, tb=None):
    """grids: (B,3,3) float32, directions: (B,2) float32 -> (B,4) float32."""
    B = grids.shape[0]
    if tb is None:
        bp8 = _round_up(max(B, 1), 8)
        if bp8 <= 8:
            tb = bp8                            # one grid step: no pipeline prime/drain waste
        elif bp8 <= 512:
            tb = _round_up(pl.cdiv(bp8, 2), 8)  # exactly 2 tiles -> both v7x TensorCores busy
        else:
            tb = 256                            # large batches; prefer tb=128 on v5e
    Bp = _round_up(B, tb)

    # Single packed activation input: grid flattened into lanes 0:9, direction in lanes
    # 9:11 (conv1 weight rows 9:16 are zero, so the direction never leaks into conv1).
    xin = jnp.zeros((Bp, 16), jnp.float32)
    xin = xin.at[:B, 0:9].set(grids.reshape(B, 9).astype(jnp.float32))
    xin = xin.at[:B, 9:11].set(directions.astype(jnp.float32))

    row_in = pl.BlockSpec((tb, 16), lambda i: (i, 0))
    row_out = pl.BlockSpec((tb, 128), lambda i: (i, 0))
    wspec = lambda w: pl.BlockSpec(w.shape, lambda i: (0, 0))  # weights resident across tiles

    weights = [kp[name] for name in
               ("w1", "b1", "g1", "be1", "w2", "b2", "g2", "be2",
                "w3", "b3", "w4", "b4", "w5a", "w5d", "b5")]

    flops = int(Bp * 2 * (16 * 512 + 2 * 256 * 128 + 3 * 128 * 128 + 16 * 128))
    w_bytes = sum(int(w.size) * int(w.dtype.itemsize) for w in weights)
    bytes_accessed = int(4 * Bp * (16 + 128) + w_bytes)

    out = pl.pallas_call(
        evalue_kernel,
        out_shape=jax.ShapeDtypeStruct((Bp, 128), jnp.float32),
        grid=(Bp // tb,),
        in_specs=[row_in] + [wspec(w) for w in weights],
        out_specs=row_out,
        compiler_params=pltpu.CompilerParams(dimension_semantics=("parallel",)),
        cost_estimate=pl.CostEstimate(flops=flops, transcendentals=3 * Bp,
                                      bytes_accessed=bytes_accessed),
    )(xin, *weights)
    return out[:B, :4]


def init_params(key):
    """Deterministic synthetic params in PyTorch layout (tp) + packed kernel layout (kp)."""
    ks = jax.random.split(key, 10)
    u = lambda k, shape, s: jax.random.uniform(k, shape, jnp.float32, -s, s)
    tp = {
        "W1": u(ks[0], (100, 1, 2, 2), 0.5), "b1": u(ks[1], (100,), 0.5),
        "W2": u(ks[2], (50, 100, 2, 2), 0.05), "b2": u(ks[3], (50,), 0.05),
        "W3": u(ks[4], (128, 50), 0.14), "b3": u(ks[5], (128,), 0.14),
        "W4": u(ks[6], (4, 128), 0.09), "b4": u(ks[7], (4,), 0.09),
        "W5": u(ks[8], (4, 6), 0.4), "b5": u(ks[9], (4,), 0.4),
        # BatchNorm affine (PyTorch default init: weight=1, bias=0)
        "g1": jnp.ones((2,), jnp.float32), "be1": jnp.zeros((2,), jnp.float32),
        "g2": jnp.ones((1,), jnp.float32), "be2": jnp.zeros((1,), jnp.float32),
    }

    W1 = np.asarray(tp["W1"]); b1 = np.asarray(tp["b1"])
    W2 = np.asarray(tp["W2"]); b2 = np.asarray(tp["b2"])
    W3 = np.asarray(tp["W3"]); b3 = np.asarray(tp["b3"])
    W4 = np.asarray(tp["W4"]); b4 = np.asarray(tp["b4"])
    W5 = np.asarray(tp["W5"]); b5 = np.asarray(tp["b5"])
    g1 = np.asarray(tp["g1"]); be1 = np.asarray(tp["be1"])
    g2 = np.asarray(tp["g2"]); be2 = np.asarray(tp["be2"])

    # conv1: im2col folded into the weight.  Row g = flattened 3x3 grid index (rows
    # 9:16 stay zero -> direction lanes never reach conv1); lane block p = h*2+w holds
    # output position p, channels 0:100.
    w1flat = W1.reshape(100, 4).T                                  # [k = kh*2+kw, c]
    w1g = np.zeros((16, 512), np.float32)
    b1g = np.zeros((1, 512), np.float32)
    for h in range(2):
        for w in range(2):
            p = h * 2 + w
            b1g[0, p * 128:p * 128 + 100] = b1
            for kh in range(2):
                for kw in range(2):
                    k = kh * 2 + kw
                    g = (h + kh) * 3 + (w + kw)
                    w1g[g, p * 128:p * 128 + 100] += w1flat[k]

    # conv2: full (p, c) contraction as a single (512, 128) weight (rows for padded
    # channels and cols 50:128 are zero so BN-shifted pad lanes never leak through).
    w2g = np.zeros((512, 128), np.float32)
    for kh in range(2):
        for kw in range(2):
            p = kh * 2 + kw
            w2g[p * 128:p * 128 + 100, 0:50] = W2[:, :, kh, kw].T
    b2g = np.zeros((1, 128), np.float32); b2g[0, 0:50] = b2

    # BN affine params broadcast to lane vectors (h=0 -> lanes [0,256), h=1 -> [256,512)).
    g1l = np.zeros((1, 512), np.float32); be1l = np.zeros((1, 512), np.float32)
    g1l[0, 0:256] = g1[0]; g1l[0, 256:512] = g1[1]
    be1l[0, 0:256] = be1[0]; be1l[0, 256:512] = be1[1]
    g2l = np.full((1, 128), g2[0], np.float32)
    be2l = np.full((1, 128), be2[0], np.float32)

    w3g = np.zeros((128, 128), np.float32); w3g[0:50, :] = W3.T
    b3g = b3.reshape(1, 128).astype(np.float32)
    w4g = np.zeros((128, 128), np.float32); w4g[:, 0:4] = W4.T
    b4g = np.zeros((1, 128), np.float32); b4g[0, 0:4] = b4
    # direction_net Linear(6,4) split: evalue part on the a4 lanes (rows 0:4 of w5a),
    # direction part on lanes 9:11 of the shared (B,16) input (rows 9:11 of w5d).
    w5a = np.zeros((128, 128), np.float32); w5a[0:4, 0:4] = W5[:, 0:4].T
    w5d = np.zeros((16, 128), np.float32);  w5d[9:11, 0:4] = W5[:, 4:6].T
    b5g = np.zeros((1, 128), np.float32); b5g[0, 0:4] = b5

    packed = {"w1": w1g, "b1": b1g, "g1": g1l, "be1": be1l,
              "w2": w2g, "b2": b2g, "g2": g2l, "be2": be2l,
              "w3": w3g, "b3": b3g, "w4": w4g, "b4": b4g,
              "w5a": w5a, "w5d": w5d, "b5": b5g}
    mxu_bf16 = {"w1", "w2", "w3", "w4", "w5a", "w5d"}     # matmul operands -> bf16 MXU rate
    kp = {name: jnp.asarray(arr, jnp.bfloat16 if name in mxu_bf16 else jnp.float32)
          for name, arr in packed.items()}
    return tp, kp


def reference_forward(grid, direction, tp):
    """Pure-JAX single-example f32 reference reproducing the PyTorch forward math."""
    x = grid.reshape(1, 3, 3).astype(jnp.float32)
    z1 = jnp.zeros((100, 2, 2), jnp.float32)
    for h in range(2):
        for w in range(2):
            val = jnp.einsum("okl,kl->o", tp["W1"][:, 0], x[0, h:h + 2, w:w + 2]) + tp["b1"]
            z1 = z1.at[:, h, w].set(val)
    # BatchNorm1d(2) training mode on (N=100, C=2, L=2): stats over axes (0, 2)
    m = jnp.mean(z1, axis=(0, 2), keepdims=True)
    v = jnp.mean((z1 - m) ** 2, axis=(0, 2), keepdims=True)
    a1 = jnp.maximum((z1 - m) / jnp.sqrt(v + EPS) * tp["g1"][None, :, None]
                     + tp["be1"][None, :, None], 0.0)
    z2 = jnp.einsum("ochw,chw->o", tp["W2"], a1) + tp["b2"]
    m2 = jnp.mean(z2)
    v2 = jnp.mean((z2 - m2) ** 2)
    a2 = jnp.maximum((z2 - m2) / jnp.sqrt(v2 + EPS) * tp["g2"][0] + tp["be2"][0], 0.0)
    a3 = jnp.maximum(tp["W3"] @ a2 + tp["b3"], 0.0)
    a4 = jnp.maximum(tp["W4"] @ a3 + tp["b4"], 0.0)
    cat = jnp.concatenate([a4, direction.astype(jnp.float32)])
    return jnp.maximum(tp["W5"] @ cat + tp["b5"], 0.0)


if __name__ == "__main__":
    key = jax.random.PRNGKey(0)
    kg, kd, kparams = jax.random.split(key, 3)
    # Batch of observations: obs['grid'] = 3x3 integer grid, obs['direction'] = 2-vector.
    B = 16
    grids = jax.random.randint(kg, (B, 3, 3), 0, 5).astype(jnp.float32)
    directions = jax.random.uniform(kd, (B, 2), jnp.float32)

    torch_params, kernel_params = init_params(kparams)

    out = jax.jit(evalue_network_forward)(grids, directions, kernel_params)
    out = jax.block_until_ready(out)
    assert out.shape == (B, 4)

    ref = jnp.stack([reference_forward(grids[b], directions[b], torch_params)
                     for b in range(B)])
    # Tolerance accounts for bf16 MXU operands vs. the pure-f32 reference.
    assert jnp.allclose(out, ref, atol=3e-2, rtol=3e-2), (out, ref)
    print("KERNEL_OK")
</pallas_src>

<mosaic_0001>
module attributes {stable_mosaic.version = 11 : i64} {
  func.func @evalue_kernel(%arg0: i32, %arg1: memref<8x16xf32, #tpu.memory_space<vmem>>, %arg2: memref<16x512xbf16, #tpu.memory_space<vmem>>, %arg3: memref<1x512xf32, #tpu.memory_space<vmem>>, %arg4: memref<1x512xf32, #tpu.memory_space<vmem>>, %arg5: memref<1x512xf32, #tpu.memory_space<vmem>>, %arg6: memref<512x128xbf16, #tpu.memory_space<vmem>>, %arg7: memref<1x128xf32, #tpu.memory_space<vmem>>, %arg8: memref<1x128xf32, #tpu.memory_space<vmem>>, %arg9: memref<1x128xf32, #tpu.memory_space<vmem>>, %arg10: memref<128x128xbf16, #tpu.memory_space<vmem>>, %arg11: memref<1x128xf32, #tpu.memory_space<vmem>>, %arg12: memref<128x128xbf16, #tpu.memory_space<vmem>>, %arg13: memref<1x128xf32, #tpu.memory_space<vmem>>, %arg14: memref<128x128xbf16, #tpu.memory_space<vmem>>, %arg15: memref<16x128xbf16, #tpu.memory_space<vmem>>, %arg16: memref<1x128xf32, #tpu.memory_space<vmem>>, %arg17: memref<8x128xf32, #tpu.memory_space<vmem>>) attributes {dimension_semantics = [#tpu.dimension_semantics<parallel>], iteration_bounds = array<i64: 2>, scalar_prefetch = 0 : i64, scratch_operands = 0 : i64, tpu.core_type = #tpu.core_type<tc>, window_params = [{transform_indices = @transform_0, window_bounds = array<i64: 8, 16>}, {pipeline_mode = #tpu.pipeline_mode<synchronous>, transform_indices = @transform_1, window_bounds = array<i64: 16, 512>}, {pipeline_mode = #tpu.pipeline_mode<synchronous>, transform_indices = @transform_2, window_bounds = array<i64: 1, 512>}, {pipeline_mode = #tpu.pipeline_mode<synchronous>, transform_indices = @transform_3, window_bounds = array<i64: 1, 512>}, {pipeline_mode = #tpu.pipeline_mode<synchronous>, transform_indices = @transform_4, window_bounds = array<i64: 1, 512>}, {pipeline_mode = #tpu.pipeline_mode<synchronous>, transform_indices = @transform_5, window_bounds = array<i64: 512, 128>}, {pipeline_mode = #tpu.pipeline_mode<synchronous>, transform_indices = @transform_6, window_bounds = array<i64: 1, 128>}, {pipeline_mode = #tpu.pipeline_mode<synchronous>, transform_indices = @transform_7, window_bounds = array<i64: 1, 128>}, {pipeline_mode = #tpu.pipeline_mode<synchronous>, transform_indices = @transform_8, window_bounds = array<i64: 1, 128>}, {pipeline_mode = #tpu.pipeline_mode<synchronous>, transform_indices = @transform_9, window_bounds = array<i64: 128, 128>}, {pipeline_mode = #tpu.pipeline_mode<synchronous>, transform_indices = @transform_10, window_bounds = array<i64: 1, 128>}, {pipeline_mode = #tpu.pipeline_mode<synchronous>, transform_indices = @transform_11, window_bounds = array<i64: 128, 128>}, {pipeline_mode = #tpu.pipeline_mode<synchronous>, transform_indices = @transform_12, window_bounds = array<i64: 1, 128>}, {pipeline_mode = #tpu.pipeline_mode<synchronous>, transform_indices = @transform_13, window_bounds = array<i64: 128, 128>}, {pipeline_mode = #tpu.pipeline_mode<synchronous>, transform_indices = @transform_14, window_bounds = array<i64: 16, 128>}, {pipeline_mode = #tpu.pipeline_mode<synchronous>, transform_indices = @transform_15, window_bounds = array<i64: 1, 128>}, {transform_indices = @transform_16, window_bounds = array<i64: 8, 128>}]} {
    %c0 = arith.constant 0 : index
    %c0_0 = arith.constant 0 : index
    %0 = vector.load %arg1[%c0, %c0_0] : memref<8x16xf32, #tpu.memory_space<vmem>>, vector<8x16xf32>
    %1 = arith.truncf %0 : vector<8x16xf32> to vector<8x16xbf16>
    %c0_1 = arith.constant 0 : index
    %c0_2 = arith.constant 0 : index
    %2 = vector.load %arg2[%c0_1, %c0_2] : memref<16x512xbf16, #tpu.memory_space<vmem>>, vector<16x512xbf16>
    %cst = arith.constant dense<0.000000e+00> : vector<8x512xf32>
    %3 = tpu.matmul %1, %2, %cst {dimension_numbers = #tpu.dot_dimension_numbers<[1], [0], [0], [1], [0, 0, 1, 1], [], []>} : vector<8x16xbf16>, vector<16x512xbf16>, vector<8x512xf32> -> vector<8x512xf32>
    %c0_3 = arith.constant 0 : index
    %c0_4 = arith.constant 0 : index
    %4 = vector.load %arg3[%c0_3, %c0_4] : memref<1x512xf32, #tpu.memory_space<vmem>>, vector<1x512xf32>
    %5 = vector.broadcast %4 : vector<1x512xf32> to vector<8x512xf32>
    %6 = arith.addf %3, %5 : vector<8x512xf32>
    %7 = vector.extract_strided_slice %6 {offsets = [0, 0], sizes = [8, 256], strides = [1, 1]} : vector<8x512xf32> to vector<8x256xf32>
    %c0_5 = arith.constant 0 : index
    %c0_6 = arith.constant 0 : index
    %8 = vector.load %arg4[%c0_5, %c0_6] : memref<1x512xf32, #tpu.memory_space<vmem>>, vector<1x256xf32>
    %c0_7 = arith.constant 0 : index
    %c0_8 = arith.constant 0 : index
    %9 = vector.load %arg5[%c0_7, %c0_8] : memref<1x512xf32, #tpu.memory_space<vmem>>, vector<1x256xf32>
    %cst_9 = arith.constant dense<0.000000e+00> : vector<8xf32>
    %10 = vector.multi_reduction <add>, %7, %cst_9 [1] : vector<8x256xf32> to vector<8xf32>
    %11 = vector.shape_cast %10 : vector<8xf32> to vector<8x1xf32>
    %cst_10 = arith.constant 5.000000e-03 : f32
    %12 = vector.broadcast %cst_10 : f32 to vector<8x1xf32>
    %13 = arith.mulf %11, %12 : vector<8x1xf32>
    %14 = vector.broadcast %13 : vector<8x1xf32> to vector<8x256xf32>
    %15 = arith.subf %7, %14 : vector<8x256xf32>
    %16 = arith.mulf %15, %15 : vector<8x256xf32>
    %cst_11 = arith.constant dense<0.000000e+00> : vector<8xf32>
    %17 = vector.multi_reduction <add>, %16, %cst_11 [1] : vector<8x256xf32> to vector<8xf32>
    %18 = vector.shape_cast %17 : vector<8xf32> to vector<8x1xf32>
    %19 = arith.mulf %13, %13 : vector<8x1xf32>
    %cst_12 = arith.constant 5.600000e+01 : f32
    %20 = vector.broadcast %cst_12 : f32 to vector<8x1xf32>
    %21 = arith.mulf %20, %19 : vector<8x1xf32>
    %22 = arith.subf %18, %21 : vector<8x1xf32>
    %cst_13 = arith.constant 5.000000e-03 : f32
    %23 = vector.broadcast %cst_13 : f32 to vector<8x1xf32>
    %24 = arith.mulf %22, %23 : vector<8x1xf32>
    %cst_14 = arith.constant 0.000000e+00 : f32
    %25 = vector.broadcast %cst_14 : f32 to vector<8x1xf32>
    %26 = arith.maximumf %24, %25 : vector<8x1xf32>
    %cst_15 = arith.constant 9.99999974E-6 : f32
    %27 = vector.broadcast %cst_15 : f32 to vector<8x1xf32>
    %28 = arith.addf %26, %27 : vector<8x1xf32>
    %29 = math.rsqrt %28 : vector<8x1xf32>
    %30 = vector.broadcast %29 : vector<8x1xf32> to vector<8x256xf32>
    %31 = vector.broadcast %8 : vector<1x256xf32> to vector<8x256xf32>
    %32 = arith.mulf %30, %31 : vector<8x256xf32>
    %33 = arith.mulf %15, %32 : vector<8x256xf32>
    %34 = vector.broadcast %9 : vector<1x256xf32> to vector<8x256xf32>
    %35 = arith.addf %33, %34 : vector<8x256xf32>
    %cst_16 = arith.constant 0.000000e+00 : f32
    %36 = vector.broadcast %cst_16 : f32 to vector<8x256xf32>
    %37 = arith.maximumf %35, %36 : vector<8x256xf32>
    %38 = vector.extract_strided_slice %6 {offsets = [0, 256], sizes = [8, 256], strides = [1, 1]} : vector<8x512xf32> to vector<8x256xf32>
    %c0_17 = arith.constant 0 : index
    %c256 = arith.constant 256 : index
    %39 = vector.load %arg4[%c0_17, %c256] : memref<1x512xf32, #tpu.memory_space<vmem>>, vector<1x256xf32>
    %c0_18 = arith.constant 0 : index
    %c256_19 = arith.constant 256 : index
    %40 = vector.load %arg5[%c0_18, %c256_19] : memref<1x512xf32, #tpu.memory_space<vmem>>, vector<1x256xf32>
    %cst_20 = arith.constant dense<0.000000e+00> : vector<8xf32>
    %41 = vector.multi_reduction <add>, %38, %cst_20 [1] : vector<8x256xf32> to vector<8xf32>
    %42 = vector.shape_cast %41 : vector<8xf32> to vector<8x1xf32>
    %cst_21 = arith.constant 5.000000e-03 : f32
    %43 = vector.broadcast %cst_21 : f32 to vector<8x1xf32>
    %44 = arith.mulf %42, %43 : vector<8x1xf32>
    %45 = vector.broadcast %44 : vector<8x1xf32> to vector<8x256xf32>
    %46 = arith.subf %38, %45 : vector<8x256xf32>
    %47 = arith.mulf %46, %46 : vector<8x256xf32>
    %cst_22 = arith.constant dense<0.000000e+00> : vector<8xf32>
    %48 = vector.multi_reduction <add>, %47, %cst_22 [1] : vector<8x256xf32> to vector<8xf32>
    %49 = vector.shape_cast %48 : vector<8xf32> to vector<8x1xf32>
    %50 = arith.mulf %44, %44 : vector<8x1xf32>
    %cst_23 = arith.constant 5.600000e+01 : f32
    %51 = vector.broadcast %cst_23 : f32 to vector<8x1xf32>
    %52 = arith.mulf %51, %50 : vector<8x1xf32>
    %53 = arith.subf %49, %52 : vector<8x1xf32>
    %cst_24 = arith.constant 5.000000e-03 : f32
    %54 = vector.broadcast %cst_24 : f32 to vector<8x1xf32>
    %55 = arith.mulf %53, %54 : vector<8x1xf32>
    %cst_25 = arith.constant 0.000000e+00 : f32
    %56 = vector.broadcast %cst_25 : f32 to vector<8x1xf32>
    %57 = arith.maximumf %55, %56 : vector<8x1xf32>
    %cst_26 = arith.constant 9.99999974E-6 : f32
    %58 = vector.broadcast %cst_26 : f32 to vector<8x1xf32>
    %59 = arith.addf %57, %58 : vector<8x1xf32>
    %60 = math.rsqrt %59 : vector<8x1xf32>
    %61 = vector.broadcast %60 : vector<8x1xf32> to vector<8x256xf32>
    %62 = vector.broadcast %39 : vector<1x256xf32> to vector<8x256xf32>
    %63 = arith.mulf %61, %62 : vector<8x256xf32>
    %64 = arith.mulf %46, %63 : vector<8x256xf32>
    %65 = vector.broadcast %40 : vector<1x256xf32> to vector<8x256xf32>
    %66 = arith.addf %64, %65 : vector<8x256xf32>
    %cst_27 = arith.constant 0.000000e+00 : f32
    %67 = vector.broadcast %cst_27 : f32 to vector<8x256xf32>
    %68 = arith.maximumf %66, %67 : vector<8x256xf32>
    %69 = arith.truncf %37 : vector<8x256xf32> to vector<8x256xbf16>
    %c0_28 = arith.constant 0 : index
    %c0_29 = arith.constant 0 : index
    %70 = vector.load %arg6[%c0_28, %c0_29] : memref<512x128xbf16, #tpu.memory_space<vmem>>, vector<256x128xbf16>
    %cst_30 = arith.constant dense<0.000000e+00> : vector<8x128xf32>
    %71 = tpu.matmul %69, %70, %cst_30 {dimension_numbers = #tpu.dot_dimension_numbers<[1], [0], [0], [1], [0, 0, 1, 1], [], []>} : vector<8x256xbf16>, vector<256x128xbf16>, vector<8x128xf32> -> vector<8x128xf32>
    %72 = arith.truncf %68 : vector<8x256xf32> to vector<8x256xbf16>
    %c256_31 = arith.constant 256 : index
    %c0_32 = arith.constant 0 : index
    %73 = vector.load %arg6[%c256_31, %c0_32] : memref<512x128xbf16, #tpu.memory_space<vmem>>, vector<256x128xbf16>
    %cst_33 = arith.constant dense<0.000000e+00> : vector<8x128xf32>
    %74 = tpu.matmul %72, %73, %cst_33 {dimension_numbers = #tpu.dot_dimension_numbers<[1], [0], [0], [1], [0, 0, 1, 1], [], []>} : vector<8x256xbf16>, vector<256x128xbf16>, vector<8x128xf32> -> vector<8x128xf32>
    %75 = arith.addf %71, %74 : vector<8x128xf32>
    %c0_34 = arith.constant 0 : index
    %c0_35 = arith.constant 0 : index
    %76 = vector.load %arg7[%c0_34, %c0_35] : memref<1x128xf32, #tpu.memory_space<vmem>>, vector<1x128xf32>
    %77 = vector.broadcast %76 : vector<1x128xf32> to vector<8x128xf32>
    %78 = arith.addf %75, %77 : vector<8x128xf32>
    %c0_36 = arith.constant 0 : index
    %c0_37 = arith.constant 0 : index
    %79 = vector.load %arg8[%c0_36, %c0_37] : memref<1x128xf32, #tpu.memory_space<vmem>>, vector<1x128xf32>
    %c0_38 = arith.constant 0 : index
    %c0_39 = arith.constant 0 : index
    %80 = vector.load %arg9[%c0_38, %c0_39] : memref<1x128xf32, #tpu.memory_space<vmem>>, vector<1x128xf32>
    %cst_40 = arith.constant dense<0.000000e+00> : vector<8xf32>
    %81 = vector.multi_reduction <add>, %78, %cst_40 [1] : vector<8x128xf32> to vector<8xf32>
    %82 = vector.shape_cast %81 : vector<8xf32> to vector<8x1xf32>
    %cst_41 = arith.constant 2.000000e-02 : f32
    %83 = vector.broadcast %cst_41 : f32 to vector<8x1xf32>
    %84 = arith.mulf %82, %83 : vector<8x1xf32>
    %85 = vector.broadcast %84 : vector<8x1xf32> to vector<8x128xf32>
    %86 = arith.subf %78, %85 : vector<8x128xf32>
    %87 = arith.mulf %86, %86 : vector<8x128xf32>
    %cst_42 = arith.constant dense<0.000000e+00> : vector<8xf32>
    %88 = vector.multi_reduction <add>, %87, %cst_42 [1] : vector<8x128xf32> to vector<8xf32>
    %89 = vector.shape_cast %88 : vector<8xf32> to vector<8x1xf32>
    %90 = arith.mulf %84, %84 : vector<8x1xf32>
    %cst_43 = arith.constant 7.800000e+01 : f32
    %91 = vector.broadcast %cst_43 : f32 to vector<8x1xf32>
    %92 = arith.mulf %91, %90 : vector<8x1xf32>
    %93 = arith.subf %89, %92 : vector<8x1xf32>
    %cst_44 = arith.constant 2.000000e-02 : f32
    %94 = vector.broadcast %cst_44 : f32 to vector<8x1xf32>
    %95 = arith.mulf %93, %94 : vector<8x1xf32>
    %cst_45 = arith.constant 0.000000e+00 : f32
    %96 = vector.broadcast %cst_45 : f32 to vector<8x1xf32>
    %97 = arith.maximumf %95, %96 : vector<8x1xf32>
    %cst_46 = arith.constant 9.99999974E-6 : f32
    %98 = vector.broadcast %cst_46 : f32 to vector<8x1xf32>
    %99 = arith.addf %97, %98 : vector<8x1xf32>
    %100 = math.rsqrt %99 : vector<8x1xf32>
    %101 = vector.broadcast %100 : vector<8x1xf32> to vector<8x128xf32>
    %102 = vector.broadcast %79 : vector<1x128xf32> to vector<8x128xf32>
    %103 = arith.mulf %101, %102 : vector<8x128xf32>
    %104 = arith.mulf %86, %103 : vector<8x128xf32>
    %105 = vector.broadcast %80 : vector<1x128xf32> to vector<8x128xf32>
    %106 = arith.addf %104, %105 : vector<8x128xf32>
    %cst_47 = arith.constant 0.000000e+00 : f32
    %107 = vector.broadcast %cst_47 : f32 to vector<8x128xf32>
    %108 = arith.maximumf %106, %107 : vector<8x128xf32>
    %109 = arith.truncf %108 : vector<8x128xf32> to vector<8x128xbf16>
    %c0_48 = arith.constant 0 : index
    %c0_49 = arith.constant 0 : index
    %110 = vector.load %arg10[%c0_48, %c0_49] : memref<128x128xbf16, #tpu.memory_space<vmem>>, vector<128x128xbf16>
    %cst_50 = arith.constant dense<0.000000e+00> : vector<8x128xf32>
    %111 = tpu.matmul %109, %110, %cst_50 {dimension_numbers = #tpu.dot_dimension_numbers<[1], [0], [0], [1], [0, 0, 1, 1], [], []>} : vector<8x128xbf16>, vector<128x128xbf16>, vector<8x128xf32> -> vector<8x128xf32>
    %c0_51 = arith.constant 0 : index
    %c0_52 = arith.constant 0 : index
    %112 = vector.load %arg11[%c0_51, %c0_52] : memref<1x128xf32, #tpu.memory_space<vmem>>, vector<1x128xf32>
    %113 = vector.broadcast %112 : vector<1x128xf32> to vector<8x128xf32>
    %114 = arith.addf %111, %113 : vector<8x128xf32>
    %cst_53 = arith.constant 0.000000e+00 : f32
    %115 = vector.broadcast %cst_53 : f32 to vector<8x128xf32>
    %116 = arith.maximumf %114, %115 : vector<8x128xf32>
    %117 = arith.truncf %116 : vector<8x128xf32> to vector<8x128xbf16>
    %c0_54 = arith.constant 0 : index
    %c0_55 = arith.constant 0 : index
    %118 = vector.load %arg12[%c0_54, %c0_55] : memref<128x128xbf16, #tpu.memory_space<vmem>>, vector<128x128xbf16>
    %cst_56 = arith.constant dense<0.000000e+00> : vector<8x128xf32>
    %119 = tpu.matmul %117, %118, %cst_56 {dimension_numbers = #tpu.dot_dimension_numbers<[1], [0], [0], [1], [0, 0, 1, 1], [], []>} : vector<8x128xbf16>, vector<128x128xbf16>, vector<8x128xf32> -> vector<8x128xf32>
    %c0_57 = arith.constant 0 : index
    %c0_58 = arith.constant 0 : index
    %120 = vector.load %arg13[%c0_57, %c0_58] : memref<1x128xf32, #tpu.memory_space<vmem>>, vector<1x128xf32>
    %121 = vector.broadcast %120 : vector<1x128xf32> to vector<8x128xf32>
    %122 = arith.addf %119, %121 : vector<8x128xf32>
    %cst_59 = arith.constant 0.000000e+00 : f32
    %123 = vector.broadcast %cst_59 : f32 to vector<8x128xf32>
    %124 = arith.maximumf %122, %123 : vector<8x128xf32>
    %125 = arith.truncf %124 : vector<8x128xf32> to vector<8x128xbf16>
    %c0_60 = arith.constant 0 : index
    %c0_61 = arith.constant 0 : index
    %126 = vector.load %arg14[%c0_60, %c0_61] : memref<128x128xbf16, #tpu.memory_space<vmem>>, vector<128x128xbf16>
    %cst_62 = arith.constant dense<0.000000e+00> : vector<8x128xf32>
    %127 = tpu.matmul %125, %126, %cst_62 {dimension_numbers = #tpu.dot_dimension_numbers<[1], [0], [0], [1], [0, 0, 1, 1], [], []>} : vector<8x128xbf16>, vector<128x128xbf16>, vector<8x128xf32> -> vector<8x128xf32>
    %c0_63 = arith.constant 0 : index
    %c0_64 = arith.constant 0 : index
    %128 = vector.load %arg15[%c0_63, %c0_64] : memref<16x128xbf16, #tpu.memory_space<vmem>>, vector<16x128xbf16>
    %cst_65 = arith.constant dense<0.000000e+00> : vector<8x128xf32>
    %129 = tpu.matmul %1, %128, %cst_65 {dimension_numbers = #tpu.dot_dimension_numbers<[1], [0], [0], [1], [0, 0, 1, 1], [], []>} : vector<8x16xbf16>, vector<16x128xbf16>, vector<8x128xf32> -> vector<8x128xf32>
    %130 = arith.addf %127, %129 : vector<8x128xf32>
    %c0_66 = arith.constant 0 : index
    %c0_67 = arith.constant 0 : index
    %131 = vector.load %arg16[%c0_66, %c0_67] : memref<1x128xf32, #tpu.memory_space<vmem>>, vector<1x128xf32>
    %132 = vector.broadcast %131 : vector<1x128xf32> to vector<8x128xf32>
    %133 = arith.addf %130, %132 : vector<8x128xf32>
    %cst_68 = arith.constant 0.000000e+00 : f32
    %134 = vector.broadcast %cst_68 : f32 to vector<8x128xf32>
    %135 = arith.maximumf %133, %134 : vector<8x128xf32>
    %c0_69 = arith.constant 0 : index
    %c0_70 = arith.constant 0 : index
    %136 = vector.load %arg17[%c0_69, %c0_70] : memref<8x128xf32, #tpu.memory_space<vmem>>, vector<8x128xf32>
    tpu.vector_store %arg17[%c0_69, %c0_70], %135 {strides = array<i32>} : memref<8x128xf32, #tpu.memory_space<vmem>>, vector<8x128xf32>,
    return
  }
  func.func @transform_0(%arg0: i32) -> (i32, i32) {
    %c0_i32 = arith.constant 0 : i32
    %c0_i32_0 = arith.constant 0 : i32
    return %arg0, %c0_i32 : i32, i32
  }
  func.func @transform_1(%arg0: i32) -> (i32, i32) {
    %c0_i32 = arith.constant 0 : i32
    %c0_i32_0 = arith.constant 0 : i32
    %c0_i32_1 = arith.constant 0 : i32
    return %c0_i32, %c0_i32_0 : i32, i32
  }
  func.func @transform_2(%arg0: i32) -> (i32, i32) {
    %c0_i32 = arith.constant 0 : i32
    %c0_i32_0 = arith.constant 0 : i32
    %c0_i32_1 = arith.constant 0 : i32
    return %c0_i32, %c0_i32_0 : i32, i32
  }
  func.func @transform_3(%arg0: i32) -> (i32, i32) {
    %c0_i32 = arith.constant 0 : i32
    %c0_i32_0 = arith.constant 0 : i32
    %c0_i32_1 = arith.constant 0 : i32
    return %c0_i32, %c0_i32_0 : i32, i32
  }
  func.func @transform_4(%arg0: i32) -> (i32, i32) {
    %c0_i32 = arith.constant 0 : i32
    %c0_i32_0 = arith.constant 0 : i32
    %c0_i32_1 = arith.constant 0 : i32
    return %c0_i32, %c0_i32_0 : i32, i32
  }
  func.func @transform_5(%arg0: i32) -> (i32, i32) {
    %c0_i32 = arith.constant 0 : i32
    %c0_i32_0 = arith.constant 0 : i32
    %c0_i32_1 = arith.constant 0 : i32
    return %c0_i32, %c0_i32_0 : i32, i32
  }
  func.func @transform_6(%arg0: i32) -> (i32, i32) {
    %c0_i32 = arith.constant 0 : i32
    %c0_i32_0 = arith.constant 0 : i32
    %c0_i32_1 = arith.constant 0 : i32
    return %c0_i32, %c0_i32_0 : i32, i32
  }
  func.func @transform_7(%arg0: i32) -> (i32, i32) {
    %c0_i32 = arith.constant 0 : i32
    %c0_i32_0 = arith.constant 0 : i32
    %c0_i32_1 = arith.constant 0 : i32
    return %c0_i32, %c0_i32_0 : i32, i32
  }
  func.func @transform_8(%arg0: i32) -> (i32, i32) {
    %c0_i32 = arith.constant 0 : i32
    %c0_i32_0 = arith.constant 0 : i32
    %c0_i32_1 = arith.constant 0 : i32
    return %c0_i32, %c0_i32_0 : i32, i32
  }
  func.func @transform_9(%arg0: i32) -> (i32, i32) {
    %c0_i32 = arith.constant 0 : i32
    %c0_i32_0 = arith.constant 0 : i32
    %c0_i32_1 = arith.constant 0 : i32
    return %c0_i32, %c0_i32_0 : i32, i32
  }
  func.func @transform_10(%arg0: i32) -> (i32, i32) {
    %c0_i32 = arith.constant 0 : i32
    %c0_i32_0 = arith.constant 0 : i32
    %c0_i32_1 = arith.constant 0 : i32
    return %c0_i32, %c0_i32_0 : i32, i32
  }
  func.func @transform_11(%arg0: i32) -> (i32, i32) {
    %c0_i32 = arith.constant 0 : i32
    %c0_i32_0 = arith.constant 0 : i32
    %c0_i32_1 = arith.constant 0 : i32
    return %c0_i32, %c0_i32_0 : i32, i32
  }
  func.func @transform_12(%arg0: i32) -> (i32, i32) {
    %c0_i32 = arith.constant 0 : i32
    %c0_i32_0 = arith.constant 0 : i32
    %c0_i32_1 = arith.constant 0 : i32
    return %c0_i32, %c0_i32_0 : i32, i32
  }
  func.func @transform_13(%arg0: i32) -> (i32, i32) {
    %c0_i32 = arith.constant 0 : i32
    %c0_i32_0 = arith.constant 0 : i32
    %c0_i32_1 = arith.constant 0 : i32
    return %c0_i32, %c0_i32_0 : i32, i32
  }
  func.func @transform_14(%arg0: i32) -> (i32, i32) {
    %c0_i32 = arith.constant 0 : i32
    %c0_i32_0 = arith.constant 0 : i32
    %c0_i32_1 = arith.constant 0 : i32
    return %c0_i32, %c0_i32_0 : i32, i32
  }
  func.func @transform_15(%arg0: i32) -> (i32, i32) {
    %c0_i32 = arith.constant 0 : i32
    %c0_i32_0 = arith.constant 0 : i32
    %c0_i32_1 = arith.constant 0 : i32
    return %c0_i32, %c0_i32_0 : i32, i32
  }
  func.func @transform_16(%arg0: i32) -> (i32, i32) {
    %c0_i32 = arith.constant 0 : i32
    %c0_i32_0 = arith.constant 0 : i32
    return %arg0, %c0_i32 : i32, i32
  }
}

</mosaic_0001>

<llo_original>
// kernel: evalue_network_forward.1
$region0: #{evalue_network_forward.1}
  #allocation0 [shape = 'u32[]', space=smem, size = 0x4, offset = 0x4, fixed_abs, tag = 'smem constant byte address 0x4 - core index']
  #allocation1 [shape = 'u32[72,128]{1,0:T(1,128)}', space=vmem, size = 0x9000, scoped, tag = 'internal scratch']
  %s0 = inlined_call_operand.vmem [shape: f32[16,16], index: 0, kind: input, shape index: {}]
  %s1 = inlined_call_operand.hbm [shape: bf16[16,512], index: 1, kind: input, shape index: {}]
  %s2 = inlined_call_operand.vmem [shape: f32[1,512], index: 2, kind: input, shape index: {}]
  %s3 = inlined_call_operand.vmem [shape: f32[1,512], index: 3, kind: input, shape index: {}]
  %s4 = inlined_call_operand.hbm [shape: f32[1,512], index: 4, kind: input, shape index: {}]
  %s5 = inlined_call_operand.hbm [shape: bf16[512,128], index: 5, kind: input, shape index: {}]
  %s6 = inlined_call_operand.hbm [shape: f32[1,128], index: 6, kind: input, shape index: {}]
  %s7 = inlined_call_operand.vmem [shape: f32[1,128], index: 7, kind: input, shape index: {}]
  %s8 = inlined_call_operand.vmem [shape: f32[1,128], index: 8, kind: input, shape index: {}]
  %s9 = inlined_call_operand.vmem [shape: bf16[128,128], index: 9, kind: input, shape index: {}]
  %s10 = inlined_call_operand.hbm [shape: f32[1,128], index: 10, kind: input, shape index: {}]
  %s11 = inlined_call_operand.vmem [shape: bf16[128,128], index: 11, kind: input, shape index: {}]
  %s12 = inlined_call_operand.hbm [shape: f32[1,128], index: 12, kind: input, shape index: {}]
  %s13 = inlined_call_operand.vmem [shape: bf16[128,128], index: 13, kind: input, shape index: {}]
  %s14 = inlined_call_operand.vmem [shape: bf16[16,128], index: 14, kind: input, shape index: {}]
  %s15 = inlined_call_operand.hbm [shape: f32[1,128], index: 15, kind: input, shape index: {}]
  %s16 = inlined_call_operand.vmem [shape: f32[16,128], index: 16, kind: output, shape index: {}]
  %s17 = sld [smem:[#allocation0]]
  $region125: #{evalue_network_forward.1} parent=0
    _
  %s19 = ssub.s32 1, %s17
  %s20 = scalar_select 0, %s19, %s17
  $region1: #{evalue_network_forward.1} parent=0
    #allocation2 [shape = 'u8[16384]{0}', space=vmem, size = 0x4000, scoped, tag = 'input window, operand 1, single buffered']
    #allocation3 [shape = 's32[2]{0}', space=sflag, size = 0x8, scoped, tag = 'scoped memory for evalue_network_forward.1']
    #allocation4 [shape = 'u8[2048]{0}', space=vmem, size = 0x800, scoped, tag = 'input window, operand 4, single buffered']
    #allocation5 [shape = 's32[1]{0}', space=sflag, size = 0x4, scoped, tag = 'scoped memory for evalue_network_forward.1']
    #allocation6 [shape = 'u8[131072]{0}', space=vmem, size = 0x20000, scoped, tag = 'input window, operand 5, single buffered']
    #allocation7 [shape = 'u8[512]{0}', space=vmem, size = 0x400, scoped, tag = 'input window, operand 6, single buffered']
    #allocation8 [shape = 's32[1]{0}', space=sflag, size = 0x4, scoped, tag = 'scoped memory for evalue_network_forward.1']
    #allocation9 [shape = 'u8[512]{0}', space=vmem, size = 0x400, scoped, tag = 'input window, operand 10, single buffered']
    #allocation10 [shape = 'u8[512]{0}', space=vmem, size = 0x400, scoped, tag = 'input window, operand 12, single buffered']
    #allocation11 [shape = 's32[1]{0}', space=sflag, size = 0x4, scoped, tag = 'scoped memory for evalue_network_forward.1']
    #allocation12 [shape = 'u8[512]{0}', space=vmem, size = 0x400, scoped, tag = 'input window, operand 15, single buffered']
    %21 = vsyncpa [#allocation3], 0
    %22 = vsyncpa [#allocation5], 0
    %23 = vsyncpa [#allocation8], 0
    %24 = vsyncpa [#allocation11], 0
    loop: start=0, step=1, limit=4
    $region2: #{evalue_network_forward.1} parent=1 // loop_pre_header
      _
    $region3: #{evalue_network_forward.1} parent=1 // loop_header
      %s26 = sphi 0, %s30
      %p27 = scmp.ge.s32.totalorder %s26, 4
      %s36 = sphi 0, %s38
      %s39 = sphi 0, %s36
      %s40 = sphi 0, %s39
      %s56 = sphi 0, %s40
      %s60 = sphi 0, %s60
      %s62 = sphi 0, %s60
      %s63 = sphi 0, %s62
      %s77 = sphi 0, %s63
      %s81 = sphi 0, %s81
      %s83 = sphi 0, %s81
      %s84 = sphi 0, %s83
      %s98 = sphi 0, %s84
      %s102 = sphi 0, %s102
      %s104 = sphi 0, %s102
      %s105 = sphi 0, %s104
      %s119 = sphi 0, %s105
      %s123 = sphi 0, %s123
      %s125 = sphi 0, %s123
      %s126 = sphi 0, %s125
      %s140 = sphi 0, %s126
      %s144 = sphi 0, %s144
      %s146 = sphi 0, %s144
      %s147 = sphi 0, %s146
      %s161 = sphi 0, %s147
      %s165 = sphi 0, %s165
      %s167 = sphi 0, %s165
      %s168 = sphi 0, %s167
      %s182 = sphi 0, %s168
      %s186 = sphi 0, %s186
      %s188 = sphi 0, %s186
      %s189 = sphi 0, %s188
      %s203 = sphi 0, %s189
      %s207 = sphi 0, %s207
      %s209 = sphi 0, %s207
      %s210 = sphi 0, %s209
      %s224 = sphi 0, %s210
      %s228 = sphi 0, %s228
      %s230 = sphi 0, %s228
      %s231 = sphi 0, %s230
      %s245 = sphi 0, %s231
      %s249 = sphi 0, %s249
      %s251 = sphi 0, %s249
      %s252 = sphi 0, %s251
      %s266 = sphi 0, %s252
      %s270 = sphi 0, %s270
      %s272 = sphi 0, %s270
      %s273 = sphi 0, %s272
      %s287 = sphi 0, %s273
      %s291 = sphi 0, %s291
      %s293 = sphi 0, %s291
      %s294 = sphi 0, %s293
      %s308 = sphi 0, %s294
      %s312 = sphi 0, %s312
      %s314 = sphi 0, %s312
      %s315 = sphi 0, %s314
      %s329 = sphi 0, %s315
      %s333 = sphi 0, %s333
      %s335 = sphi 0, %s333
      %s336 = sphi 0, %s335
      %s350 = sphi 0, %s336
      %s354 = sphi 0, %s354
      %s356 = sphi 0, %s354
      %s357 = sphi 0, %s356
      %s371 = sphi 0, %s357
      %s377 = sphi 0, %s379
      %s380 = sphi 0, %s377
      %s381 = sphi 0, %s380
      %s397 = sphi 0, %s381
    $region4: #{evalue_network_forward.1} parent=1 // loop_header_branch
      %29 = sbr.rel (%p27) target = $region8
    $region5: #{evalue_network_forward.1} parent=1 // loop_body
      %s31 = ssub.s32 %s26, 1
      %s32 = ssub.s32 %s26, 2
      %s33 = sadd.s32 %s26, 1
      %s34 = ssub.s32 %s26, %s33
      %p35 = scmp.eq.s32.totalorder %s34, 0
      %s37 = sadd.s32 %s36, 1
      %s38 = scalar_select %p35, %s36, %s37
      %p41 = pneg %p35
      %p42 = scmp.eq.s32.totalorder %s26, 1
      %p43 = por %p41, %p42
      %p44 = scmp.ne.s32.totalorder %s36, %s39
      %p45 = scmp.eq.s32.totalorder %s26, 0
      %p46 = por %p44, %p45
      %p47 = scmp.ne.s32.totalorder %s36, %s39
      %p48 = scmp.eq.s32.totalorder %s31, 1
      %p49 = por %p47, %p48
      %p50 = scmp.ne.s32.totalorder %s39, %s40
      %p51 = scmp.eq.s32.totalorder %s31, 0
      %p52 = por %p50, %p51
      %p53 = scmp.ne.s32.totalorder %s39, %s40
      %p54 = scmp.eq.s32.totalorder %s32, 1
      %p55 = por %p53, %p54
      %p57 = scmp.ne.s32.totalorder %s40, %s56
      %p58 = scmp.eq.s32.totalorder %s32, 0
      %p59 = por %p57, %p58
      %s61 = sadd.s32 %s60, 1
      %p64 = scmp.eq.s32.totalorder %s26, 1
      %p65 = scmp.ne.s32.totalorder %s60, %s62
      %p66 = scmp.eq.s32.totalorder %s26, 0
      %p67 = por %p65, %p66
      %p68 = scmp.ne.s32.totalorder %s60, %s62
      %p69 = scmp.eq.s32.totalorder %s31, 1
      %p70 = por %p68, %p69
      %p71 = scmp.ne.s32.totalorder %s62, %s63
      %p72 = scmp.eq.s32.totalorder %s31, 0
      %p73 = por %p71, %p72
      %p74 = scmp.ne.s32.totalorder %s62, %s63
      %p75 = scmp.eq.s32.totalorder %s32, 1
      %p76 = por %p74, %p75
      %p78 = scmp.ne.s32.totalorder %s63, %s77
      %p79 = scmp.eq.s32.totalorder %s32, 0
      %p80 = por %p78, %p79
      %s82 = sadd.s32 %s81, 1
      %p85 = scmp.eq.s32.totalorder %s26, 1
      %p86 = scmp.ne.s32.totalorder %s81, %s83
      %p87 = scmp.eq.s32.totalorder %s26, 0
      %p88 = por %p86, %p87
      %p89 = scmp.ne.s32.totalorder %s81, %s83
      %p90 = scmp.eq.s32.totalorder %s31, 1
      %p91 = por %p89, %p90
      %p92 = scmp.ne.s32.totalorder %s83, %s84
      %p93 = scmp.eq.s32.totalorder %s31, 0
      %p94 = por %p92, %p93
      %p95 = scmp.ne.s32.totalorder %s83, %s84
      %p96 = scmp.eq.s32.totalorder %s32, 1
      %p97 = por %p95, %p96
      %p99 = scmp.ne.s32.totalorder %s84, %s98
      %p100 = scmp.eq.s32.totalorder %s32, 0
      %p101 = por %p99, %p100
      %s103 = sadd.s32 %s102, 1
      %p106 = scmp.eq.s32.totalorder %s26, 1
      %p107 = scmp.ne.s32.totalorder %s102, %s104
      %p108 = scmp.eq.s32.totalorder %s26, 0
      %p109 = por %p107, %p108
      %p110 = scmp.ne.s32.totalorder %s102, %s104
      %p111 = scmp.eq.s32.totalorder %s31, 1
      %p112 = por %p110, %p111
      %p113 = scmp.ne.s32.totalorder %s104, %s105
      %p114 = scmp.eq.s32.totalorder %s31, 0
      %p115 = por %p113, %p114
      %p116 = scmp.ne.s32.totalorder %s104, %s105
      %p117 = scmp.eq.s32.totalorder %s32, 1
      %p118 = por %p116, %p117
      %p120 = scmp.ne.s32.totalorder %s105, %s119
      %p121 = scmp.eq.s32.totalorder %s32, 0
      %p122 = por %p120, %p121
      %s124 = sadd.s32 %s123, 1
      %p127 = scmp.eq.s32.totalorder %s26, 1
      %p128 = scmp.ne.s32.totalorder %s123, %s125
      %p129 = scmp.eq.s32.totalorder %s26, 0
      %p130 = por %p128, %p129
      %p131 = scmp.ne.s32.totalorder %s123, %s125
      %p132 = scmp.eq.s32.totalorder %s31, 1
      %p133 = por %p131, %p132
      %p134 = scmp.ne.s32.totalorder %s125, %s126
      %p135 = scmp.eq.s32.totalorder %s31, 0
      %p136 = por %p134, %p135
      %p137 = scmp.ne.s32.totalorder %s125, %s126
      %p138 = scmp.eq.s32.totalorder %s32, 1
      %p139 = por %p137, %p138
      %p141 = scmp.ne.s32.totalorder %s126, %s140
      %p142 = scmp.eq.s32.totalorder %s32, 0
      %p143 = por %p141, %p142
      %s145 = sadd.s32 %s144, 1
      %p148 = scmp.eq.s32.totalorder %s26, 1
      %p149 = scmp.ne.s32.totalorder %s144, %s146
      %p150 = scmp.eq.s32.totalorder %s26, 0
      %p151 = por %p149, %p150
      %p152 = scmp.ne.s32.totalorder %s144, %s146
      %p153 = scmp.eq.s32.totalorder %s31, 1
      %p154 = por %p152, %p153
      %p155 = scmp.ne.s32.totalorder %s146, %s147
      %p156 = scmp.eq.s32.totalorder %s31, 0
      %p157 = por %p155, %p156
      %p158 = scmp.ne.s32.totalorder %s146, %s147
      %p159 = scmp.eq.s32.totalorder %s32, 1
      %p160 = por %p158, %p159
      %p162 = scmp.ne.s32.totalorder %s147, %s161
      %p163 = scmp.eq.s32.totalorder %s32, 0
      %p164 = por %p162, %p163
      %s166 = sadd.s32 %s165, 1
      %p169 = scmp.eq.s32.totalorder %s26, 1
      %p170 = scmp.ne.s32.totalorder %s165, %s167
      %p171 = scmp.eq.s32.totalorder %s26, 0
      %p172 = por %p170, %p171
      %p173 = scmp.ne.s32.totalorder %s165, %s167
      %p174 = scmp.eq.s32.totalorder %s31, 1
      %p175 = por %p173, %p174
      %p176 = scmp.ne.s32.totalorder %s167, %s168
      %p177 = scmp.eq.s32.totalorder %s31, 0
      %p178 = por %p176, %p177
      %p179 = scmp.ne.s32.totalorder %s167, %s168
      %p180 = scmp.eq.s32.totalorder %s32, 1
      %p181 = por %p179, %p180
      %p183 = scmp.ne.s32.totalorder %s168, %s182
      %p184 = scmp.eq.s32.totalorder %s32, 0
      %p185 = por %p183, %p184
      %s187 = sadd.s32 %s186, 1
      %p190 = scmp.eq.s32.totalorder %s26, 1
      %p191 = scmp.ne.s32.totalorder %s186, %s188
      %p192 = scmp.eq.s32.totalorder %s26, 0
      %p193 = por %p191, %p192
      %p194 = scmp.ne.s32.totalorder %s186, %s188
      %p195 = scmp.eq.s32.totalorder %s31, 1
      %p196 = por %p194, %p195
      %p197 = scmp.ne.s32.totalorder %s188, %s189
      %p198 = scmp.eq.s32.totalorder %s31, 0
      %p199 = por %p197, %p198
      %p200 = scmp.ne.s32.totalorder %s188, %s189
      %p201 = scmp.eq.s32.totalorder %s32, 1
      %p202 = por %p200, %p201
      %p204 = scmp.ne.s32.totalorder %s189, %s203
      %p205 = scmp.eq.s32.totalorder %s32, 0
      %p206 = por %p204, %p205
      %s208 = sadd.s32 %s207, 1
      %p211 = scmp.eq.s32.totalorder %s26, 1
      %p212 = scmp.ne.s32.totalorder %s207, %s209
      %p213 = scmp.eq.s32.totalorder %s26, 0
      %p214 = por %p212, %p213
      %p215 = scmp.ne.s32.totalorder %s207, %s209
      %p216 = scmp.eq.s32.totalorder %s31, 1
      %p217 = por %p215, %p216
      %p218 = scmp.ne.s32.totalorder %s209, %s210
      %p219 = scmp.eq.s32.totalorder %s31, 0
      %p220 = por %p218, %p219
      %p221 = scmp.ne.s32.totalorder %s209, %s210
      %p222 = scmp.eq.s32.totalorder %s32, 1
      %p223 = por %p221, %p222
      %p225 = scmp.ne.s32.totalorder %s210, %s224
      %p226 = scmp.eq.s32.totalorder %s32, 0
      %p227 = por %p225, %p226
      %s229 = sadd.s32 %s228, 1
      %p232 = scmp.eq.s32.totalorder %s26, 1
      %p233 = scmp.ne.s32.totalorder %s228, %s230
      %p234 = scmp.eq.s32.totalorder %s26, 0
      %p235 = por %p233, %p234
      %p236 = scmp.ne.s32.totalorder %s228, %s230
      %p237 = scmp.eq.s32.totalorder %s31, 1
      %p238 = por %p236, %p237
      %p239 = scmp.ne.s32.totalorder %s230, %s231
      %p240 = scmp.eq.s32.totalorder %s31, 0
      %p241 = por %p239, %p240
      %p242 = scmp.ne.s32.totalorder %s230, %s231
      %p243 = scmp.eq.s32.totalorder %s32, 1
      %p244 = por %p242, %p243
      %p246 = scmp.ne.s32.totalorder %s231, %s245
      %p247 = scmp.eq.s32.totalorder %s32, 0
      %p248 = por %p246, %p247
      %s250 = sadd.s32 %s249, 1
      %p253 = scmp.eq.s32.totalorder %s26, 1
      %p254 = scmp.ne.s32.totalorder %s249, %s251
      %p255 = scmp.eq.s32.totalorder %s26, 0
      %p256 = por %p254, %p255
      %p257 = scmp.ne.s32.totalorder %s249, %s251
      %p258 = scmp.eq.s32.totalorder %s31, 1
      %p259 = por %p257, %p258
      %p260 = scmp.ne.s32.totalorder %s251, %s252
      %p261 = scmp.eq.s32.totalorder %s31, 0
      %p262 = por %p260, %p261
      %p263 = scmp.ne.s32.totalorder %s251, %s252
      %p264 = scmp.eq.s32.totalorder %s32, 1
      %p265 = por %p263, %p264
      %p267 = scmp.ne.s32.totalorder %s252, %s266
      %p268 = scmp.eq.s32.totalorder %s32, 0
      %p269 = por %p267, %p268
      %s271 = sadd.s32 %s270, 1
      %p274 = scmp.eq.s32.totalorder %s26, 1
      %p275 = scmp.ne.s32.totalorder %s270, %s272
      %p276 = scmp.eq.s32.totalorder %s26, 0
      %p277 = por %p275, %p276
      %p278 = scmp.ne.s32.totalorder %s270, %s272
      %p279 = scmp.eq.s32.totalorder %s31, 1
      %p280 = por %p278, %p279
      %p281 = scmp.ne.s32.totalorder %s272, %s273
      %p282 = scmp.eq.s32.totalorder %s31, 0
      %p283 = por %p281, %p282
      %p284 = scmp.ne.s32.totalorder %s272, %s273
      %p285 = scmp.eq.s32.totalorder %s32, 1
      %p286 = por %p284, %p285
      %p288 = scmp.ne.s32.totalorder %s273, %s287
      %p289 = scmp.eq.s32.totalorder %s32, 0
      %p290 = por %p288, %p289
      %s292 = sadd.s32 %s291, 1
      %p295 = scmp.eq.s32.totalorder %s26, 1
      %p296 = scmp.ne.s32.totalorder %s291, %s293
      %p297 = scmp.eq.s32.totalorder %s26, 0
      %p298 = por %p296, %p297
      %p299 = scmp.ne.s32.totalorder %s291, %s293
      %p300 = scmp.eq.s32.totalorder %s31, 1
      %p301 = por %p299, %p300
      %p302 = scmp.ne.s32.totalorder %s293, %s294
      %p303 = scmp.eq.s32.totalorder %s31, 0
      %p304 = por %p302, %p303
      %p305 = scmp.ne.s32.totalorder %s293, %s294
      %p306 = scmp.eq.s32.totalorder %s32, 1
      %p307 = por %p305, %p306
      %p309 = scmp.ne.s32.totalorder %s294, %s308
      %p310 = scmp.eq.s32.totalorder %s32, 0
      %p311 = por %p309, %p310
      %s313 = sadd.s32 %s312, 1
      %p316 = scmp.eq.s32.totalorder %s26, 1
      %p317 = scmp.ne.s32.totalorder %s312, %s314
      %p318 = scmp.eq.s32.totalorder %s26, 0
      %p319 = por %p317, %p318
      %p320 = scmp.ne.s32.totalorder %s312, %s314
      %p321 = scmp.eq.s32.totalorder %s31, 1
      %p322 = por %p320, %p321
      %p323 = scmp.ne.s32.totalorder %s314, %s315
      %p324 = scmp.eq.s32.totalorder %s31, 0
      %p325 = por %p323, %p324
      %p326 = scmp.ne.s32.totalorder %s314, %s315
      %p327 = scmp.eq.s32.totalorder %s32, 1
      %p328 = por %p326, %p327
      %p330 = scmp.ne.s32.totalorder %s315, %s329
      %p331 = scmp.eq.s32.totalorder %s32, 0
      %p332 = por %p330, %p331
      %s334 = sadd.s32 %s333, 1
      %p337 = scmp.eq.s32.totalorder %s26, 1
      %p338 = scmp.ne.s32.totalorder %s333, %s335
      %p339 = scmp.eq.s32.totalorder %s26, 0
      %p340 = por %p338, %p339
      %p341 = scmp.ne.s32.totalorder %s333, %s335
      %p342 = scmp.eq.s32.totalorder %s31, 1
      %p343 = por %p341, %p342
      %p344 = scmp.ne.s32.totalorder %s335, %s336
      %p345 = scmp.eq.s32.totalorder %s31, 0
      %p346 = por %p344, %p345
      %p347 = scmp.ne.s32.totalorder %s335, %s336
      %p348 = scmp.eq.s32.totalorder %s32, 1
      %p349 = por %p347, %p348
      %p351 = scmp.ne.s32.totalorder %s336, %s350
      %p352 = scmp.eq.s32.totalorder %s32, 0
      %p353 = por %p351, %p352
      %s355 = sadd.s32 %s354, 1
      %p358 = scmp.eq.s32.totalorder %s26, 1
      %p359 = scmp.ne.s32.totalorder %s354, %s356
      %p360 = scmp.eq.s32.totalorder %s26, 0
      %p361 = por %p359, %p360
      %p362 = scmp.ne.s32.totalorder %s354, %s356
      %p363 = scmp.eq.s32.totalorder %s31, 1
      %p364 = por %p362, %p363
      %p365 = scmp.ne.s32.totalorder %s356, %s357
      %p366 = scmp.eq.s32.totalorder %s31, 0
      %p367 = por %p365, %p366
      %p368 = scmp.ne.s32.totalorder %s356, %s357
      %p369 = scmp.eq.s32.totalorder %s32, 1
      %p370 = por %p368, %p369
      %p372 = scmp.ne.s32.totalorder %s357, %s371
      %p373 = scmp.eq.s32.totalorder %s32, 0
      %p374 = por %p372, %p373
      %s375 = ssub.s32 %s26, %s33
      %p376 = scmp.eq.s32.totalorder %s375, 0
      %s378 = sadd.s32 %s377, 1
      %s379 = scalar_select %p376, %s377, %s378
      %p382 = pneg %p376
      %p383 = scmp.eq.s32.totalorder %s26, 1
      %p384 = por %p382, %p383
      %p385 = scmp.ne.s32.totalorder %s377, %s380
      %p386 = scmp.eq.s32.totalorder %s26, 0
      %p387 = por %p385, %p386
      %p388 = scmp.ne.s32.totalorder %s377, %s380
      %p389 = scmp.eq.s32.totalorder %s31, 1
      %p390 = por %p388, %p389
      %p391 = scmp.ne.s32.totalorder %s380, %s381
      %p392 = scmp.eq.s32.totalorder %s31, 0
      %p393 = por %p391, %p392
      %p394 = scmp.ne.s32.totalorder %s380, %s381
      %p395 = scmp.eq.s32.totalorder %s32, 1
      %p396 = por %p394, %p395
      %p398 = scmp.ne.s32.totalorder %s381, %s397
      %p399 = scmp.eq.s32.totalorder %s32, 0
      %p400 = por %p398, %p399
      %p401 = scmp.le.s32.totalorder 1, %s26
      %p402 = scmp.lt.s32.totalorder %s26, 3
      %p403 = pnand %p401, %p402
      %p404 = pneg %p403
      // Predicated region
      $region9: #{evalue_network_forward.1} parent=5 // pred_check
        _
      $region10: #{evalue_network_forward.1} parent=5 // pred_check_branch
        %406 = sbr.rel (%p403) target = $region12
      $region11: #{evalue_network_forward.1} parent=5 // pred_region
        %s407 = ssub.s32 %s26, 1
        // Predicated region
        $region13: #{evalue_network_forward.1} parent=11 // pred_check
          %p408 = pneg %p73
        $region14: #{evalue_network_forward.1} parent=11 // pred_check_branch
          %410 = sbr.rel (%p408) target = $region16
        $region15: #{evalue_network_forward.1} parent=11 // pred_region
          %412 = vsyncadd [#allocation3], 0
          %s413 = sshll.u32 %s1, 4
          %s414 = int_to_ptr.hbm [resolvable:$true] %s413
          %s415 = sshll.u32 [#allocation2], 4
          %s416 = int_to_ptr.vmem [resolvable:$true] %s415
          %421 = dma.hbm_to_vmem [thread:$0]  %s414, 512, %s416, [#allocation3], 256, 256, 16
        $region16: #{evalue_network_forward.1} parent=11 // pred_fallthru
          _
        // Predicated region
        $region17: #{evalue_network_forward.1} parent=11 // pred_check
          %p422 = pneg %p94
        $region18: #{evalue_network_forward.1} parent=11 // pred_check_branch
          %424 = sbr.rel (%p422) target = $region20
        $region19: #{evalue_network_forward.1} parent=11 // pred_region
          _
        $region20: #{evalue_network_forward.1} parent=11 // pred_fallthru
          _
        // Predicated region
        $region21: #{evalue_network_forward.1} parent=11 // pred_check
          %p425 = pneg %p115
        $region22: #{evalue_network_forward.1} parent=11 // pred_check_branch
          %427 = sbr.rel (%p425) target = $region24
        $region23: #{evalue_network_forward.1} parent=11 // pred_region
          _
        $region24: #{evalue_network_forward.1} parent=11 // pred_fallthru
          _
        // Predicated region
        $region25: #{evalue_network_forward.1} parent=11 // pred_check
          %p428 = pneg %p136
        $region26: #{evalue_network_forward.1} parent=11 // pred_check_branch
          %430 = sbr.rel (%p428) target = $region28
        $region27: #{evalue_network_forward.1} parent=11 // pred_region
          %432 = vsyncadd [#allocation5], 0
          %s434 = sshll.u32 %s4, 4
          %s435 = int_to_ptr.hbm [resolvable:$true] %s434
          %s436 = sshll.u32 [#allocation4], 4
          %s437 = int_to_ptr.vmem [resolvable:$true] %s436
          %439 = dma.hbm_to_vmem [thread:$0]  %s435, 64, %s437, [#allocation5]
        $region28: #{evalue_network_forward.1} parent=11 // pred_fallthru
          _
        // Predicated region
        $region29: #{evalue_network_forward.1} parent=11 // pred_check
          %p440 = pneg %p157
        $region30: #{evalue_network_forward.1} parent=11 // pred_check_branch
          %442 = sbr.rel (%p440) target = $region32
        $region31: #{evalue_network_forward.1} parent=11 // pred_region
          %444 = vsyncadd [#allocation5], 0
          %s445 = sshll.u32 %s5, 4
          %s446 = int_to_ptr.hbm [resolvable:$true] %s445
          %s447 = sshll.u32 [#allocation6], 4
          %s448 = int_to_ptr.vmem [resolvable:$true] %s447
          %453 = dma.hbm_to_vmem [thread:$0]  %s446, 4096, %s448, [#allocation5], 64, 64, 4
        $region32: #{evalue_network_forward.1} parent=11 // pred_fallthru
          _
        // Predicated region
        $region33: #{evalue_network_forward.1} parent=11 // pred_check
          %p454 = pneg %p178
        $region34: #{evalue_network_forward.1} parent=11 // pred_check_branch
          %456 = sbr.rel (%p454) target = $region36
        $region35: #{evalue_network_forward.1} parent=11 // pred_region
          %458 = vsyncadd [#allocation8], 0
          %s460 = sshll.u32 %s6, 4
          %s461 = int_to_ptr.hbm [resolvable:$true] %s460
          %s462 = sshll.u32 [#allocation7], 4
          %s463 = int_to_ptr.vmem [resolvable:$true] %s462
          %465 = dma.hbm_to_vmem [thread:$0]  %s461, 16, %s463, [#allocation8]
        $region36: #{evalue_network_forward.1} parent=11 // pred_fallthru
          _
        // Predicated region
        $region37: #{evalue_network_forward.1} parent=11 // pred_check
          %p466 = pneg %p199
        $region38: #{evalue_network_forward.1} parent=11 // pred_check_branch
          %468 = sbr.rel (%p466) target = $region40
        $region39: #{evalue_network_forward.1} parent=11 // pred_region
          _
        $region40: #{evalue_network_forward.1} parent=11 // pred_fallthru
          _
        // Predicated region
        $region41: #{evalue_network_forward.1} parent=11 // pred_check
          %p469 = pneg %p220
        $region42: #{evalue_network_forward.1} parent=11 // pred_check_branch
          %471 = sbr.rel (%p469) target = $region44
        $region43: #{evalue_network_forward.1} parent=11 // pred_region
          _
        $region44: #{evalue_network_forward.1} parent=11 // pred_fallthru
          _
        // Predicated region
        $region45: #{evalue_network_forward.1} parent=11 // pred_check
          %p472 = pneg %p241
        $region46: #{evalue_network_forward.1} parent=11 // pred_check_branch
          %474 = sbr.rel (%p472) target = $region48
        $region47: #{evalue_network_forward.1} parent=11 // pred_region
          _
        $region48: #{evalue_network_forward.1} parent=11 // pred_fallthru
          _
        // Predicated region
        $region49: #{evalue_network_forward.1} parent=11 // pred_check
          %p475 = pneg %p262
        $region50: #{evalue_network_forward.1} parent=11 // pred_check_branch
          %477 = sbr.rel (%p475) target = $region52
        $region51: #{evalue_network_forward.1} parent=11 // pred_region
          %479 = vsyncadd [#allocation8], 0
          %s481 = sshll.u32 %s10, 4
          %s482 = int_to_ptr.hbm [resolvable:$true] %s481
          %s483 = sshll.u32 [#allocation9], 4
          %s484 = int_to_ptr.vmem [resolvable:$true] %s483
          %486 = dma.hbm_to_vmem [thread:$0]  %s482, 16, %s484, [#allocation8]
        $region52: #{evalue_network_forward.1} parent=11 // pred_fallthru
          _
        // Predicated region
        $region53: #{evalue_network_forward.1} parent=11 // pred_check
          %p487 = pneg %p283
        $region54: #{evalue_network_forward.1} parent=11 // pred_check_branch
          %489 = sbr.rel (%p487) target = $region56
        $region55: #{evalue_network_forward.1} parent=11 // pred_region
          _
        $region56: #{evalue_network_forward.1} parent=11 // pred_fallthru
          _
        // Predicated region
        $region57: #{evalue_network_forward.1} parent=11 // pred_check
          %p490 = pneg %p304
        $region58: #{evalue_network_forward.1} parent=11 // pred_check_branch
          %492 = sbr.rel (%p490) target = $region60
        $region59: #{evalue_network_forward.1} parent=11 // pred_region
          %494 = vsyncadd [#allocation11], 0
          %s496 = sshll.u32 %s12, 4
          %s497 = int_to_ptr.hbm [resolvable:$true] %s496
          %s498 = sshll.u32 [#allocation10], 4
          %s499 = int_to_ptr.vmem [resolvable:$true] %s498
          %501 = dma.hbm_to_vmem [thread:$0]  %s497, 16, %s499, [#allocation11]
        $region60: #{evalue_network_forward.1} parent=11 // pred_fallthru
          _
        // Predicated region
        $region61: #{evalue_network_forward.1} parent=11 // pred_check
          %p502 = pneg %p325
        $region62: #{evalue_network_forward.1} parent=11 // pred_check_branch
          %504 = sbr.rel (%p502) target = $region64
        $region63: #{evalue_network_forward.1} parent=11 // pred_region
          _
        $region64: #{evalue_network_forward.1} parent=11 // pred_fallthru
          _
        // Predicated region
        $region65: #{evalue_network_forward.1} parent=11 // pred_check
          %p505 = pneg %p346
        $region66: #{evalue_network_forward.1} parent=11 // pred_check_branch
          %507 = sbr.rel (%p505) target = $region68
        $region67: #{evalue_network_forward.1} parent=11 // pred_region
          _
        $region68: #{evalue_network_forward.1} parent=11 // pred_fallthru
          _
        // Predicated region
        $region69: #{evalue_network_forward.1} parent=11 // pred_check
          %p508 = pneg %p367
        $region70: #{evalue_network_forward.1} parent=11 // pred_check_branch
          %510 = sbr.rel (%p508) target = $region72
        $region71: #{evalue_network_forward.1} parent=11 // pred_region
          %512 = vsyncadd [#allocation11], 0
          %s514 = sshll.u32 %s15, 4
          %s515 = int_to_ptr.hbm [resolvable:$true] %s514
          %s516 = sshll.u32 [#allocation12], 4
          %s517 = int_to_ptr.vmem [resolvable:$true] %s516
          %519 = dma.hbm_to_vmem [thread:$0]  %s515, 16, %s517, [#allocation11]
        $region72: #{evalue_network_forward.1} parent=11 // pred_fallthru
          _
      $region12: #{evalue_network_forward.1} parent=5 // pred_fallthru
        _
      %p520 = scmp.lt.s32.totalorder %s26, 2
      // Predicated region
      $region73: #{evalue_network_forward.1} parent=5 // pred_check
        %p521 = pneg %p520
      $region74: #{evalue_network_forward.1} parent=5 // pred_check_branch
        %523 = sbr.rel (%p521) target = $region76
      $region75: #{evalue_network_forward.1} parent=5 // pred_region
        // Predicated region
        $region77: #{evalue_network_forward.1} parent=75 // pred_check
          %p524 = pneg %p46
        $region78: #{evalue_network_forward.1} parent=75 // pred_check_branch
          %526 = sbr.rel (%p524) target = $region80
        $region79: #{evalue_network_forward.1} parent=75 // pred_region
          %p527 = scmp.lt.s32.totalorder %s26, 1
          %s528 = scalar_select %p527, %s26, 1
          %s529 = smul.addr %s528, 8
          %s530 = scalar_lea.vmem %s0, %s529
        $region80: #{evalue_network_forward.1} parent=75 // pred_fallthru
          _
      $region76: #{evalue_network_forward.1} parent=5 // pred_fallthru
        _
      %p531 = scmp.le.s32.totalorder 1, %s26
      %p532 = scmp.lt.s32.totalorder %s26, 3
      %p533 = pnand %p531, %p532
      %p534 = pneg %p533
      // Predicated region
      $region81: #{evalue_network_forward.1} parent=5 // pred_check
        _
      $region82: #{evalue_network_forward.1} parent=5 // pred_check_branch
        %536 = sbr.rel (%p533) target = $region84
      $region83: #{evalue_network_forward.1} parent=5 // pred_region
        %s537 = ssub.s32 %s26, 1
        // Predicated region
        $region85: #{evalue_network_forward.1} parent=83 // pred_check
          %p538 = pneg %p73
        $region86: #{evalue_network_forward.1} parent=83 // pred_check_branch
          %540 = sbr.rel (%p538) target = $region88
        $region87: #{evalue_network_forward.1} parent=83 // pred_region
          %542 = dma.done [#allocation3], 512
        $region88: #{evalue_network_forward.1} parent=83 // pred_fallthru
          _
        // Predicated region
        $region89: #{evalue_network_forward.1} parent=83 // pred_check
          %p543 = pneg %p136
        $region90: #{evalue_network_forward.1} parent=83 // pred_check_branch
          %545 = sbr.rel (%p543) target = $region92
        $region91: #{evalue_network_forward.1} parent=83 // pred_region
          %547 = dma.done [#allocation5], 64
        $region92: #{evalue_network_forward.1} parent=83 // pred_fallthru
          _
        // Predicated region
        $region93: #{evalue_network_forward.1} parent=83 // pred_check
          %p548 = pneg %p157
        $region94: #{evalue_network_forward.1} parent=83 // pred_check_branch
          %550 = sbr.rel (%p548) target = $region96
        $region95: #{evalue_network_forward.1} parent=83 // pred_region
          %552 = dma.done [#allocation5], 4096
        $region96: #{evalue_network_forward.1} parent=83 // pred_fallthru
          _
        // Predicated region
        $region97: #{evalue_network_forward.1} parent=83 // pred_check
          %p553 = pneg %p178
        $region98: #{evalue_network_forward.1} parent=83 // pred_check_branch
          %555 = sbr.rel (%p553) target = $region100
        $region99: #{evalue_network_forward.1} parent=83 // pred_region
          %557 = dma.done [#allocation8], 16
        $region100: #{evalue_network_forward.1} parent=83 // pred_fallthru
          _
        // Predicated region
        $region101: #{evalue_network_forward.1} parent=83 // pred_check
          %p558 = pneg %p262
        $region102: #{evalue_network_forward.1} parent=83 // pred_check_branch
          %560 = sbr.rel (%p558) target = $region104
        $region103: #{evalue_network_forward.1} parent=83 // pred_region
          %562 = dma.done [#allocation8], 16
        $region104: #{evalue_network_forward.1} parent=83 // pred_fallthru
          _
        // Predicated region
        $region105: #{evalue_network_forward.1} parent=83 // pred_check
          %p563 = pneg %p304
        $region106: #{evalue_network_forward.1} parent=83 // pred_check_branch
          %565 = sbr.rel (%p563) target = $region108
        $region107: #{evalue_network_forward.1} parent=83 // pred_region
          %567 = dma.done [#allocation11], 16
        $region108: #{evalue_network_forward.1} parent=83 // pred_fallthru
          _
        // Predicated region
        $region109: #{evalue_network_forward.1} parent=83 // pred_check
          %p568 = pneg %p367
        $region110: #{evalue_network_forward.1} parent=83 // pred_check_branch
          %570 = sbr.rel (%p568) target = $region112
        $region111: #{evalue_network_forward.1} parent=83 // pred_region
          %572 = dma.done [#allocation11], 16
        $region112: #{evalue_network_forward.1} parent=83 // pred_fallthru
          _
        %p573 = scmp.lt.s32.totalorder %s31, 1
        %s574 = scalar_select %p573, %s31, 1
        %s575 = smul.addr %s574, 8
        %s576 = scalar_lea.vmem %s0, %s575
        %p577 = pneg %p52
        %p578 = pneg %p49
        %p579 = pneg %p73
        %p580 = pneg %p70
        %p581 = pneg %p94
        %p582 = pneg %p91
        %p583 = pneg %p115
        %p584 = pneg %p112
        %p585 = pneg %p136
        %p586 = pneg %p133
        %p587 = pneg %p157
        %p588 = pneg %p154
        %p589 = pneg %p178
        %p590 = pneg %p175
        %p591 = pneg %p199
        %p592 = pneg %p196
        %p593 = pneg %p220
        %p594 = pneg %p217
        %p595 = pneg %p241
        %p596 = pneg %p238
        %p597 = pneg %p262
        %p598 = pneg %p259
        %p599 = pneg %p283
        %p600 = pneg %p280
        %p601 = pneg %p304
        %p602 = pneg %p301
        %p603 = pneg %p325
        %p604 = pneg %p322
        %p605 = pneg %p346
        %p606 = pneg %p343
        %p607 = pneg %p367
        %p608 = pneg %p364
        %p609 = pneg %p393
        %p610 = pneg %p390
        %p611 = scmp.lt.s32.totalorder %s31, 1
        %s612 = scalar_select %p611, %s31, 1
        %s613 = smul.addr %s612, 8
        %s614 = scalar_lea.vmem %s16, %s613
        %p615 = scmp.lt.s32.totalorder %s31, 1
        %s616 = scalar_select %p615, %s31, 1
        %s617 = smul.addr %s616, 8
        %s618 = scalar_lea.vmem %s0, %s617
        %p619 = scmp.lt.s32.totalorder %s31, 1
        %s620 = scalar_select %p619, %s31, 1
        %s621 = smul.addr %s620, 8
        %s622 = scalar_lea.vmem %s16, %s621
        %v624 = vld [vmem:[%s618] sm:$0xff]
        %v625 = vpack.c.bf16 %v624, %v624
        %v626 = vld [vmem:[#allocation2] sm:$0xff]
        %v627 = vld [vmem:[#allocation2 + $0x8] sm:$0xff]
        %v628 = vld [vmem:[#allocation2 + $0x10] sm:$0xff]
        %v629 = vld [vmem:[#allocation2 + $0x18] sm:$0xff]
        %v630 = vld [vmem:[%s2] sm:$0xf]
        %v632 = vperm.slane %v630, 0
        %v633 = vperm.slane %v630, 1
        %v634 = vperm.slane %v630, 2
        %v635 = vperm.slane %v630, 3
        %v644 = vunpack.c.l.b16 %v626
        %v645 = vunpack.c.h.b16 %v626
        %v646 = vunpack.c.l.b16 %v627
        %v647 = vunpack.c.h.b16 %v627
        %v648 = vunpack.c.l.b16 %v628
        %v649 = vunpack.c.h.b16 %v628
        %v650 = vunpack.c.l.b16 %v629
        %v651 = vunpack.c.h.b16 %v629
        %v652 = vpack.c.b16 %v648, %v644
        %v653 = vpack.c.b16 %v649, %v645
        %v654 = vpack.c.b16 %v650, %v646
        %v655 = vpack.c.b16 %v651, %v647
        %vm660 = vcmask 130048
        %v662 = vsel %vm660, %v625, 0
        %664 = vmatpush.bf16.msra.mxu0 0
        %665 = vmatpush.bf16.msra.mxu0 0
        %666 = vmatpush.bf16.msra.mxu0 0
        %667 = vmatpush.bf16.msra.mxu0 0
        %668 = vmatpush.bf16.msra.mxu0 0
        %669 = vmatpush.bf16.msra.mxu0 0
        %670 = vmatpush.bf16.msra.mxu0 0
        %671 = vmatpush.bf16.msra.mxu0 %v652
        %672 = vmatmul.bf16.gmra.mxu0 %v662
        %v673 = vpop.f32.mrf.mxu0
        %v674 = vadd.f32 %v632, %v673
        %v675 = vpop.f32.mrf.mxu0
        %676 = vdwg.mxu0
        %677 = vmatpush.bf16.msra.mxu0 0
        %678 = vmatpush.bf16.msra.mxu0 0
        %679 = vmatpush.bf16.msra.mxu0 0
        %680 = vmatpush.bf16.msra.mxu0 0
        %681 = vmatpush.bf16.msra.mxu0 0
        %682 = vmatpush.bf16.msra.mxu0 0
        %683 = vmatpush.bf16.msra.mxu0 0
        %684 = vmatpush.bf16.msra.mxu0 %v653
        %685 = vmatmul.bf16.gmra.mxu0 %v662
        %v686 = vpop.f32.mrf.mxu0
        %v687 = vadd.f32 %v633, %v686
        %v688 = vpop.f32.mrf.mxu0
        %689 = vdwg.mxu0
        %690 = vmatpush.bf16.msra.mxu0 0
        %691 = vmatpush.bf16.msra.mxu0 0
        %692 = vmatpush.bf16.msra.mxu0 0
        %693 = vmatpush.bf16.msra.mxu0 0
        %694 = vmatpush.bf16.msra.mxu0 0
        %695 = vmatpush.bf16.msra.mxu0 0
        %696 = vmatpush.bf16.msra.mxu0 0
        %697 = vmatpush.bf16.msra.mxu0 %v654
        %698 = vmatmul.bf16.gmra.mxu0 %v662
        %v699 = vpop.f32.mrf.mxu0
        %v700 = vadd.f32 %v634, %v699
        %v701 = vpop.f32.mrf.mxu0
        %702 = vdwg.mxu0
        %703 = vmatpush.bf16.msra.mxu0 0
        %704 = vmatpush.bf16.msra.mxu0 0
        %705 = vmatpush.bf16.msra.mxu0 0
        %706 = vmatpush.bf16.msra.mxu0 0
        %707 = vmatpush.bf16.msra.mxu0 0
        %708 = vmatpush.bf16.msra.mxu0 0
        %709 = vmatpush.bf16.msra.mxu0 0
        %710 = vmatpush.bf16.msra.mxu0 %v655
        %711 = vmatmul.bf16.gmra.mxu0 %v662
        %v712 = vpop.f32.mrf.mxu0
        %v713 = vadd.f32 %v635, %v712
        %v714 = vpop.f32.mrf.mxu0
        %715 = vdwg.mxu0
        %v716 = vld [vmem:[%s3] sm:$0x3]
        %v717 = vld [vmem:[#allocation4] sm:$0x3]
        %v718 = vadd.f32 %v674, %v687
        %719 = vadd.xlane.f32.xlu0 %v718
        %v720 = vpop.xlane.xlu0 %719
        %v721 = vmul.f32 %v720, 0.005
        %v722 = vsub.f32 %v674, %v721
        %v723 = vsub.f32 %v687, %v721
        %v724 = vmul.f32 %v722, %v722
        %v725 = vmul.f32 %v723, %v723
        %v726 = vadd.f32 %v724, %v725
        %727 = vadd.xlane.f32.xlu0 %v726
        %v728 = vpop.xlane.xlu0 %727
        %v729 = vmul.f32 %v721, %v721
        %v730 = vmul.f32 %v729, 56.0
        %v731 = vsub.f32 %v728, %v730
        %v732 = vmul.f32 %v731, 0.005
        %v733 = vmax.f32 %v732, 0.0
        %v734 = vadd.f32 %v733, 1e-05
        %v735 = vrsqrt.pop %v734
        %v736 = vmul.f32 %v735, %v734
        %v737 = vmul.f32 %v736, %v735
        %v738 = vmul.f32 0.5, %v737
        %v739 = vsub.f32 1.5, %v738
        %v740 = vmul.f32 %v735, %v739
        %vm741 = vweird.f32 %v734
        %vm742 = vweird.f32 %v735
        %vm743 = vmor %vm741, %vm742
        %v744 = vsel %vm743, %v735, %v740
        %v746 = vperm.slane %v716, 0
        %v747 = vperm.slane %v716, 1
        %v750 = vmul.f32 %v744, %v746
        %v751 = vmul.f32 %v744, %v747
        %v752 = vmul.f32 %v722, %v750
        %v753 = vmul.f32 %v723, %v751
        %v755 = vperm.slane %v717, 0
        %v756 = vperm.slane %v717, 1
        %v759 = vadd.f32 %v752, %v755
        %v760 = vadd.f32 %v753, %v756
        %v761 = vmax.f32 %v759, 0.0
        %v762 = vmax.f32 %v760, 0.0
        %v763 = vld [vmem:[%s3 + $0x2] sm:$0x3]
        %v764 = vld [vmem:[#allocation4 + $0x2] sm:$0x3]
        %v765 = vadd.f32 %v700, %v713
        %766 = vadd.xlane.f32.xlu0 %v765
        %v767 = vpop.xlane.xlu0 %766
        %v768 = vmul.f32 %v767, 0.005
        %v769 = vsub.f32 %v700, %v768
        %v770 = vsub.f32 %v713, %v768
        %v771 = vmul.f32 %v769, %v769
        %v772 = vmul.f32 %v770, %v770
        %v773 = vadd.f32 %v771, %v772
        %774 = vadd.xlane.f32.xlu0 %v773
        %v775 = vpop.xlane.xlu0 %774
        %v776 = vmul.f32 %v768, %v768
        %v777 = vmul.f32 %v776, 56.0
        %v778 = vsub.f32 %v775, %v777
        %v779 = vmul.f32 %v778, 0.005
        %v780 = vmax.f32 %v779, 0.0
        %v781 = vadd.f32 %v780, 1e-05
        %v782 = vrsqrt.pop %v781
        %v783 = vmul.f32 %v782, %v781
        %v784 = vmul.f32 %v783, %v782
        %v785 = vmul.f32 0.5, %v784
        %v786 = vsub.f32 1.5, %v785
        %v787 = vmul.f32 %v782, %v786
        %vm788 = vweird.f32 %v781
        %vm789 = vweird.f32 %v782
        %vm790 = vmor %vm788, %vm789
        %v791 = vsel %vm790, %v782, %v787
        %v793 = vperm.slane %v763, 0
        %v794 = vperm.slane %v763, 1
        %v797 = vmul.f32 %v791, %v793
        %v798 = vmul.f32 %v791, %v794
        %v799 = vmul.f32 %v769, %v797
        %v800 = vmul.f32 %v770, %v798
        %v802 = vperm.slane %v764, 0
        %v803 = vperm.slane %v764, 1
        %v806 = vadd.f32 %v799, %v802
        %v807 = vadd.f32 %v800, %v803
        %v808 = vmax.f32 %v806, 0.0
        %v809 = vmax.f32 %v807, 0.0
        %v810 = vpack.c.bf16 %v761, %v761
        %v811 = vpack.c.bf16 %v762, %v762
        %v812 = vld [vmem:[#allocation6] sm:$0xf]
        %v813 = vld [vmem:[#allocation6 + $0x4] sm:$0xf]
        %v814 = vld [vmem:[#allocation6 + $0x8] sm:$0xf]
        %v815 = vld [vmem:[#allocation6 + $0xc] sm:$0xf]
        %v816 = vld [vmem:[#allocation6 + $0x10] sm:$0xf]
        %v817 = vld [vmem:[#allocation6 + $0x14] sm:$0xf]
        %v818 = vld [vmem:[#allocation6 + $0x18] sm:$0xf]
        %v819 = vld [vmem:[#allocation6 + $0x1c] sm:$0xf]
        %v820 = vld [vmem:[#allocation6 + $0x20] sm:$0xf]
        %v821 = vld [vmem:[#allocation6 + $0x24] sm:$0xf]
        %v822 = vld [vmem:[#allocation6 + $0x28] sm:$0xf]
        %v823 = vld [vmem:[#allocation6 + $0x2c] sm:$0xf]
        %v824 = vld [vmem:[#allocation6 + $0x30] sm:$0xf]
        %v825 = vld [vmem:[#allocation6 + $0x34] sm:$0xf]
        %v826 = vld [vmem:[#allocation6 + $0x38] sm:$0xf]
        %v827 = vld [vmem:[#allocation6 + $0x3c] sm:$0xf]
        %v828 = vld [vmem:[#allocation6 + $0x40] sm:$0xf]
        %v829 = vld [vmem:[#allocation6 + $0x44] sm:$0xf]
        %v830 = vld [vmem:[#allocation6 + $0x48] sm:$0xf]
        %v831 = vld [vmem:[#allocation6 + $0x4c] sm:$0xf]
        %v832 = vld [vmem:[#allocation6 + $0x50] sm:$0xf]
        %v833 = vld [vmem:[#allocation6 + $0x54] sm:$0xf]
        %v834 = vld [vmem:[#allocation6 + $0x58] sm:$0xf]
        %v835 = vld [vmem:[#allocation6 + $0x5c] sm:$0xf]
        %v836 = vld [vmem:[#allocation6 + $0x60] sm:$0xf]
        %v837 = vld [vmem:[#allocation6 + $0x64] sm:$0xf]
        %v838 = vld [vmem:[#allocation6 + $0x68] sm:$0xf]
        %v839 = vld [vmem:[#allocation6 + $0x6c] sm:$0xf]
        %v840 = vld [vmem:[#allocation6 + $0x70] sm:$0xf]
        %v841 = vld [vmem:[#allocation6 + $0x74] sm:$0xf]
        %v842 = vld [vmem:[#allocation6 + $0x78] sm:$0xf]
        %v843 = vld [vmem:[#allocation6 + $0x7c] sm:$0xf]
        %v844 = vpack.c.bf16 %v808, %v808
        %v845 = vpack.c.bf16 %v809, %v809
        %v846 = vld [vmem:[#allocation6 + $0x80] sm:$0xf]
        %v847 = vld [vmem:[#allocation6 + $0x84] sm:$0xf]
        %v848 = vld [vmem:[#allocation6 + $0x88] sm:$0xf]
        %v849 = vld [vmem:[#allocation6 + $0x8c] sm:$0xf]
        %v850 = vld [vmem:[#allocation6 + $0x90] sm:$0xf]
        %v851 = vld [vmem:[#allocation6 + $0x94] sm:$0xf]
        %v852 = vld [vmem:[#allocation6 + $0x98] sm:$0xf]
        %v853 = vld [vmem:[#allocation6 + $0x9c] sm:$0xf]
        %v854 = vld [vmem:[#allocation6 + $0xa0] sm:$0xf]
        %v855 = vld [vmem:[#allocation6 + $0xa4] sm:$0xf]
        %v856 = vld [vmem:[#allocation6 + $0xa8] sm:$0xf]
        %v857 = vld [vmem:[#allocation6 + $0xac] sm:$0xf]
        %v858 = vld [vmem:[#allocation6 + $0xb0] sm:$0xf]
        %v859 = vld [vmem:[#allocation6 + $0xb4] sm:$0xf]
        %v860 = vld [vmem:[#allocation6 + $0xb8] sm:$0xf]
        %v861 = vld [vmem:[#allocation6 + $0xbc] sm:$0xf]
        %v862 = vld [vmem:[#allocation6 + $0xc0] sm:$0xf]
        %v863 = vld [vmem:[#allocation6 + $0xc4] sm:$0xf]
        %v864 = vld [vmem:[#allocation6 + $0xc8] sm:$0xf]
        %v865 = vld [vmem:[#allocation6 + $0xcc] sm:$0xf]
        %v866 = vld [vmem:[#allocation6 + $0xd0] sm:$0xf]
        %v867 = vld [vmem:[#allocation6 + $0xd4] sm:$0xf]
        %v868 = vld [vmem:[#allocation6 + $0xd8] sm:$0xf]
        %v869 = vld [vmem:[#allocation6 + $0xdc] sm:$0xf]
        %v870 = vld [vmem:[#allocation6 + $0xe0] sm:$0xf]
        %v871 = vld [vmem:[#allocation6 + $0xe4] sm:$0xf]
        %v872 = vld [vmem:[#allocation6 + $0xe8] sm:$0xf]
        %v873 = vld [vmem:[#allocation6 + $0xec] sm:$0xf]
        %v874 = vld [vmem:[#allocation6 + $0xf0] sm:$0xf]
        %v875 = vld [vmem:[#allocation6 + $0xf4] sm:$0xf]
        %v876 = vld [vmem:[#allocation6 + $0xf8] sm:$0xf]
        %v877 = vld [vmem:[#allocation6 + $0xfc] sm:$0xf]
        %v910 = vunpack.c.l.b16 %v846
        %v911 = vunpack.c.l.b16 %v847
        %v912 = vunpack.c.l.b16 %v848
        %v913 = vunpack.c.l.b16 %v849
        %v914 = vunpack.c.l.b16 %v850
        %v915 = vunpack.c.l.b16 %v851
        %v916 = vunpack.c.l.b16 %v852
        %v917 = vunpack.c.l.b16 %v853
        %v918 = vunpack.c.l.b16 %v854
        %v919 = vunpack.c.l.b16 %v855
        %v920 = vunpack.c.l.b16 %v856
        %v921 = vunpack.c.l.b16 %v857
        %v922 = vunpack.c.l.b16 %v858
        %v923 = vunpack.c.l.b16 %v859
        %v924 = vunpack.c.l.b16 %v860
        %v925 = vunpack.c.l.b16 %v861
        %v926 = vunpack.c.l.b16 %v862
        %v927 = vunpack.c.l.b16 %v863
        %v928 = vunpack.c.l.b16 %v864
        %v929 = vunpack.c.l.b16 %v865
        %v930 = vunpack.c.l.b16 %v866
        %v931 = vunpack.c.l.b16 %v867
        %v932 = vunpack.c.l.b16 %v868
        %v933 = vunpack.c.l.b16 %v869
        %v934 = vunpack.c.l.b16 %v870
        %v935 = vunpack.c.l.b16 %v871
        %v936 = vunpack.c.l.b16 %v872
        %v937 = vunpack.c.l.b16 %v873
        %v938 = vunpack.c.l.b16 %v874
        %v939 = vunpack.c.l.b16 %v875
        %v940 = vunpack.c.l.b16 %v876
        %v941 = vunpack.c.l.b16 %v877
        %v942 = vpack.c.b16 %v911, %v910
        %v943 = vpack.c.b16 %v913, %v912
        %v944 = vpack.c.b16 %v915, %v914
        %v945 = vpack.c.b16 %v917, %v916
        %v946 = vpack.c.b16 %v919, %v918
        %v947 = vpack.c.b16 %v921, %v920
        %v948 = vpack.c.b16 %v923, %v922
        %v949 = vpack.c.b16 %v925, %v924
        %v950 = vpack.c.b16 %v927, %v926
        %v951 = vpack.c.b16 %v929, %v928
        %v952 = vpack.c.b16 %v931, %v930
        %v953 = vpack.c.b16 %v933, %v932
        %v954 = vpack.c.b16 %v935, %v934
        %v955 = vpack.c.b16 %v937, %v936
        %v956 = vpack.c.b16 %v939, %v938
        %v957 = vpack.c.b16 %v941, %v940
        %974 = vmatpush.bf16.msra.mxu0 %v949
        %975 = vmatpush.bf16.msra.mxu0 %v948
        %976 = vmatpush.bf16.msra.mxu0 %v947
        %977 = vmatpush.bf16.msra.mxu0 %v946
        %978 = vmatpush.bf16.msra.mxu0 %v945
        %979 = vmatpush.bf16.msra.mxu0 %v944
        %980 = vmatpush.bf16.msra.mxu0 %v943
        %981 = vmatpush.bf16.msra.mxu0 %v942
        %982 = vmatmul.bf16.gmra.mxu0 %v844
        %v983 = vpop.f32.mrf.mxu0
        %v984 = vadd.f32 0.0, %v983
        %v985 = vpop.f32.mrf.mxu0
        %986 = vdwg.mxu0
        %987 = vmatpush.bf16.msra.mxu0 %v957
        %988 = vmatpush.bf16.msra.mxu0 %v956
        %989 = vmatpush.bf16.msra.mxu0 %v955
        %990 = vmatpush.bf16.msra.mxu0 %v954
        %991 = vmatpush.bf16.msra.mxu0 %v953
        %992 = vmatpush.bf16.msra.mxu0 %v952
        %993 = vmatpush.bf16.msra.mxu0 %v951
        %994 = vmatpush.bf16.msra.mxu0 %v950
        %995 = vmatmul.bf16.gmra.mxu0 %v845
        %v996 = vpop.f32.mrf.mxu0
        %v997 = vadd.f32 %v984, %v996
        %v998 = vpop.f32.mrf.mxu0
        %999 = vdwg.mxu0
        %v1032 = vunpack.c.l.b16 %v812
        %v1033 = vunpack.c.l.b16 %v813
        %v1034 = vunpack.c.l.b16 %v814
        %v1035 = vunpack.c.l.b16 %v815
        %v1036 = vunpack.c.l.b16 %v816
        %v1037 = vunpack.c.l.b16 %v817
        %v1038 = vunpack.c.l.b16 %v818
        %v1039 = vunpack.c.l.b16 %v819
        %v1040 = vunpack.c.l.b16 %v820
        %v1041 = vunpack.c.l.b16 %v821
        %v1042 = vunpack.c.l.b16 %v822
        %v1043 = vunpack.c.l.b16 %v823
        %v1044 = vunpack.c.l.b16 %v824
        %v1045 = vunpack.c.l.b16 %v825
        %v1046 = vunpack.c.l.b16 %v826
        %v1047 = vunpack.c.l.b16 %v827
        %v1048 = vunpack.c.l.b16 %v828
        %v1049 = vunpack.c.l.b16 %v829
        %v1050 = vunpack.c.l.b16 %v830
        %v1051 = vunpack.c.l.b16 %v831
        %v1052 = vunpack.c.l.b16 %v832
        %v1053 = vunpack.c.l.b16 %v833
        %v1054 = vunpack.c.l.b16 %v834
        %v1055 = vunpack.c.l.b16 %v835
        %v1056 = vunpack.c.l.b16 %v836
        %v1057 = vunpack.c.l.b16 %v837
        %v1058 = vunpack.c.l.b16 %v838
        %v1059 = vunpack.c.l.b16 %v839
        %v1060 = vunpack.c.l.b16 %v840
        %v1061 = vunpack.c.l.b16 %v841
        %v1062 = vunpack.c.l.b16 %v842
        %v1063 = vunpack.c.l.b16 %v843
        %v1064 = vpack.c.b16 %v1033, %v1032
        %v1065 = vpack.c.b16 %v1035, %v1034
        %v1066 = vpack.c.b16 %v1037, %v1036
        %v1067 = vpack.c.b16 %v1039, %v1038
        %v1068 = vpack.c.b16 %v1041, %v1040
        %v1069 = vpack.c.b16 %v1043, %v1042
        %v1070 = vpack.c.b16 %v1045, %v1044
        %v1071 = vpack.c.b16 %v1047, %v1046
        %v1072 = vpack.c.b16 %v1049, %v1048
        %v1073 = vpack.c.b16 %v1051, %v1050
        %v1074 = vpack.c.b16 %v1053, %v1052
        %v1075 = vpack.c.b16 %v1055, %v1054
        %v1076 = vpack.c.b16 %v1057, %v1056
        %v1077 = vpack.c.b16 %v1059, %v1058
        %v1078 = vpack.c.b16 %v1061, %v1060
        %v1079 = vpack.c.b16 %v1063, %v1062
        %1096 = vmatpush.bf16.msra.mxu0 %v1071
        %1097 = vmatpush.bf16.msra.mxu0 %v1070
        %1098 = vmatpush.bf16.msra.mxu0 %v1069
        %1099 = vmatpush.bf16.msra.mxu0 %v1068
        %1100 = vmatpush.bf16.msra.mxu0 %v1067
        %1101 = vmatpush.bf16.msra.mxu0 %v1066
        %1102 = vmatpush.bf16.msra.mxu0 %v1065
        %1103 = vmatpush.bf16.msra.mxu0 %v1064
        %1104 = vmatmul.bf16.gmra.mxu0 %v810
        %v1105 = vpop.f32.mrf.mxu0
        %v1106 = vadd.f32 %v997, %v1105
        %v1107 = vpop.f32.mrf.mxu0
        %1108 = vdwg.mxu0
        %1109 = vmatpush.bf16.msra.mxu0 %v1079
        %1110 = vmatpush.bf16.msra.mxu0 %v1078
        %1111 = vmatpush.bf16.msra.mxu0 %v1077
        %1112 = vmatpush.bf16.msra.mxu0 %v1076
        %1113 = vmatpush.bf16.msra.mxu0 %v1075
        %1114 = vmatpush.bf16.msra.mxu0 %v1074
        %1115 = vmatpush.bf16.msra.mxu0 %v1073
        %1116 = vmatpush.bf16.msra.mxu0 %v1072
        %1117 = vmatmul.bf16.gmra.mxu0 %v811
        %v1118 = vpop.f32.mrf.mxu0
        %v1119 = vadd.f32 %v1106, %v1118
        %v1120 = vpop.f32.mrf.mxu0
        %1121 = vdwg.mxu0
        %v1122 = vld [vmem:[#allocation7] sm:$0x1]
        %v1124 = vperm.slane %v1122, 0
        %v1126 = vadd.f32 %v1119, %v1124
        %v1127 = vld [vmem:[%s7] sm:$0x1]
        %v1128 = vld [vmem:[%s8] sm:$0x1]
        %1129 = vadd.xlane.f32.xlu0 %v1126
        %v1130 = vpop.xlane.xlu0 %1129
        %v1131 = vmul.f32 %v1130, 0.02
        %v1132 = vsub.f32 %v1126, %v1131
        %v1133 = vmul.f32 %v1132, %v1132
        %1134 = vadd.xlane.f32.xlu0 %v1133
        %v1135 = vpop.xlane.xlu0 %1134
        %v1136 = vmul.f32 %v1131, %v1131
        %v1137 = vmul.f32 %v1136, 78.0
        %v1138 = vsub.f32 %v1135, %v1137
        %v1139 = vmul.f32 %v1138, 0.02
        %v1140 = vmax.f32 %v1139, 0.0
        %v1141 = vadd.f32 %v1140, 1e-05
        %v1142 = vrsqrt.pop %v1141
        %v1143 = vmul.f32 %v1142, %v1141
        %v1144 = vmul.f32 %v1143, %v1142
        %v1145 = vmul.f32 0.5, %v1144
        %v1146 = vsub.f32 1.5, %v1145
        %v1147 = vmul.f32 %v1142, %v1146
        %vm1148 = vweird.f32 %v1141
        %vm1149 = vweird.f32 %v1142
        %vm1150 = vmor %vm1148, %vm1149
        %v1151 = vsel %vm1150, %v1142, %v1147
        %v1153 = vperm.slane %v1127, 0
        %v1155 = vmul.f32 %v1151, %v1153
        %v1156 = vmul.f32 %v1132, %v1155
        %v1158 = vperm.slane %v1128, 0
        %v1160 = vadd.f32 %v1156, %v1158
        %v1161 = vmax.f32 %v1160, 0.0
        %v1162 = vpack.c.bf16 %v1161, %v1161
        %v1163 = vld [vmem:[%s9] sm:$0xf]
        %v1164 = vld [vmem:[%s9 + $0x4] sm:$0xf]
        %v1165 = vld [vmem:[%s9 + $0x8] sm:$0xf]
        %v1166 = vld [vmem:[%s9 + $0xc] sm:$0xf]
        %v1167 = vld [vmem:[%s9 + $0x10] sm:$0xf]
        %v1168 = vld [vmem:[%s9 + $0x14] sm:$0xf]
        %v1169 = vld [vmem:[%s9 + $0x18] sm:$0xf]
        %v1170 = vld [vmem:[%s9 + $0x1c] sm:$0xf]
        %v1171 = vld [vmem:[%s9 + $0x20] sm:$0xf]
        %v1172 = vld [vmem:[%s9 + $0x24] sm:$0xf]
        %v1173 = vld [vmem:[%s9 + $0x28] sm:$0xf]
        %v1174 = vld [vmem:[%s9 + $0x2c] sm:$0xf]
        %v1175 = vld [vmem:[%s9 + $0x30] sm:$0xf]
        %v1176 = vld [vmem:[%s9 + $0x34] sm:$0xf]
        %v1177 = vld [vmem:[%s9 + $0x38] sm:$0xf]
        %v1178 = vld [vmem:[%s9 + $0x3c] sm:$0xf]
        %v1179 = vld [vmem:[#allocation9] sm:$0x1]
        %v1181 = vperm.slane %v1179, 0
        %v1199 = vunpack.c.l.b16 %v1163
        %v1200 = vunpack.c.l.b16 %v1164
        %v1201 = vunpack.c.l.b16 %v1165
        %v1202 = vunpack.c.l.b16 %v1166
        %v1203 = vunpack.c.l.b16 %v1167
        %v1204 = vunpack.c.l.b16 %v1168
        %v1205 = vunpack.c.l.b16 %v1169
        %v1206 = vunpack.c.l.b16 %v1170
        %v1207 = vunpack.c.l.b16 %v1171
        %v1208 = vunpack.c.l.b16 %v1172
        %v1209 = vunpack.c.l.b16 %v1173
        %v1210 = vunpack.c.l.b16 %v1174
        %v1211 = vunpack.c.l.b16 %v1175
        %v1212 = vunpack.c.l.b16 %v1176
        %v1213 = vunpack.c.l.b16 %v1177
        %v1214 = vunpack.c.l.b16 %v1178
        %v1215 = vpack.c.b16 %v1200, %v1199
        %v1216 = vpack.c.b16 %v1202, %v1201
        %v1217 = vpack.c.b16 %v1204, %v1203
        %v1218 = vpack.c.b16 %v1206, %v1205
        %v1219 = vpack.c.b16 %v1208, %v1207
        %v1220 = vpack.c.b16 %v1210, %v1209
        %v1221 = vpack.c.b16 %v1212, %v1211
        %v1222 = vpack.c.b16 %v1214, %v1213
        %1231 = vmatpush.bf16.msra.mxu0 %v1222
        %1232 = vmatpush.bf16.msra.mxu0 %v1221
        %1233 = vmatpush.bf16.msra.mxu0 %v1220
        %1234 = vmatpush.bf16.msra.mxu0 %v1219
        %1235 = vmatpush.bf16.msra.mxu0 %v1218
        %1236 = vmatpush.bf16.msra.mxu0 %v1217
        %1237 = vmatpush.bf16.msra.mxu0 %v1216
        %1238 = vmatpush.bf16.msra.mxu0 %v1215
        %1239 = vmatmul.bf16.gmra.mxu0 %v1162
        %v1240 = vpop.f32.mrf.mxu0
        %v1241 = vadd.f32 %v1181, %v1240
        %v1242 = vpop.f32.mrf.mxu0
        %1243 = vdwg.mxu0
        %v1244 = vmax.f32 %v1241, 0.0
        %v1245 = vpack.c.bf16 %v1244, %v1244
        %v1246 = vld [vmem:[%s11] sm:$0xf]
        %v1247 = vld [vmem:[%s11 + $0x4] sm:$0xf]
        %v1248 = vld [vmem:[%s11 + $0x8] sm:$0xf]
        %v1249 = vld [vmem:[%s11 + $0xc] sm:$0xf]
        %v1250 = vld [vmem:[%s11 + $0x10] sm:$0xf]
        %v1251 = vld [vmem:[%s11 + $0x14] sm:$0xf]
        %v1252 = vld [vmem:[%s11 + $0x18] sm:$0xf]
        %v1253 = vld [vmem:[%s11 + $0x1c] sm:$0xf]
        %v1254 = vld [vmem:[%s11 + $0x20] sm:$0xf]
        %v1255 = vld [vmem:[%s11 + $0x24] sm:$0xf]
        %v1256 = vld [vmem:[%s11 + $0x28] sm:$0xf]
        %v1257 = vld [vmem:[%s11 + $0x2c] sm:$0xf]
        %v1258 = vld [vmem:[%s11 + $0x30] sm:$0xf]
        %v1259 = vld [vmem:[%s11 + $0x34] sm:$0xf]
        %v1260 = vld [vmem:[%s11 + $0x38] sm:$0xf]
        %v1261 = vld [vmem:[%s11 + $0x3c] sm:$0xf]
        %v1262 = vld [vmem:[#allocation10] sm:$0x1]
        %v1264 = vperm.slane %v1262, 0
        %v1282 = vunpack.c.l.b16 %v1246
        %v1283 = vunpack.c.l.b16 %v1247
        %v1284 = vunpack.c.l.b16 %v1248
        %v1285 = vunpack.c.l.b16 %v1249
        %v1286 = vunpack.c.l.b16 %v1250
        %v1287 = vunpack.c.l.b16 %v1251
        %v1288 = vunpack.c.l.b16 %v1252
        %v1289 = vunpack.c.l.b16 %v1253
        %v1290 = vunpack.c.l.b16 %v1254
        %v1291 = vunpack.c.l.b16 %v1255
        %v1292 = vunpack.c.l.b16 %v1256
        %v1293 = vunpack.c.l.b16 %v1257
        %v1294 = vunpack.c.l.b16 %v1258
        %v1295 = vunpack.c.l.b16 %v1259
        %v1296 = vunpack.c.l.b16 %v1260
        %v1297 = vunpack.c.l.b16 %v1261
        %v1298 = vpack.c.b16 %v1283, %v1282
        %v1299 = vpack.c.b16 %v1285, %v1284
        %v1300 = vpack.c.b16 %v1287, %v1286
        %v1301 = vpack.c.b16 %v1289, %v1288
        %v1302 = vpack.c.b16 %v1291, %v1290
        %v1303 = vpack.c.b16 %v1293, %v1292
        %v1304 = vpack.c.b16 %v1295, %v1294
        %v1305 = vpack.c.b16 %v1297, %v1296
        %1314 = vmatpush.bf16.msra.mxu0 %v1305
        %1315 = vmatpush.bf16.msra.mxu0 %v1304
        %1316 = vmatpush.bf16.msra.mxu0 %v1303
        %1317 = vmatpush.bf16.msra.mxu0 %v1302
        %1318 = vmatpush.bf16.msra.mxu0 %v1301
        %1319 = vmatpush.bf16.msra.mxu0 %v1300
        %1320 = vmatpush.bf16.msra.mxu0 %v1299
        %1321 = vmatpush.bf16.msra.mxu0 %v1298
        %1322 = vmatmul.bf16.gmra.mxu0 %v1245
        %v1323 = vpop.f32.mrf.mxu0
        %v1324 = vadd.f32 %v1264, %v1323
        %v1325 = vpop.f32.mrf.mxu0
        %1326 = vdwg.mxu0
        %v1327 = vmax.f32 %v1324, 0.0
        %v1328 = vpack.c.bf16 %v1327, %v1327
        %v1329 = vld [vmem:[%s13] sm:$0xf]
        %v1330 = vld [vmem:[%s13 + $0x4] sm:$0xf]
        %v1331 = vld [vmem:[%s13 + $0x8] sm:$0xf]
        %v1332 = vld [vmem:[%s13 + $0xc] sm:$0xf]
        %v1333 = vld [vmem:[%s13 + $0x10] sm:$0xf]
        %v1334 = vld [vmem:[%s13 + $0x14] sm:$0xf]
        %v1335 = vld [vmem:[%s13 + $0x18] sm:$0xf]
        %v1336 = vld [vmem:[%s13 + $0x1c] sm:$0xf]
        %v1337 = vld [vmem:[%s13 + $0x20] sm:$0xf]
        %v1338 = vld [vmem:[%s13 + $0x24] sm:$0xf]
        %v1339 = vld [vmem:[%s13 + $0x28] sm:$0xf]
        %v1340 = vld [vmem:[%s13 + $0x2c] sm:$0xf]
        %v1341 = vld [vmem:[%s13 + $0x30] sm:$0xf]
        %v1342 = vld [vmem:[%s13 + $0x34] sm:$0xf]
        %v1343 = vld [vmem:[%s13 + $0x38] sm:$0xf]
        %v1344 = vld [vmem:[%s13 + $0x3c] sm:$0xf]
        %v1345 = vld [vmem:[%s14] sm:$0xf]
        %v1346 = vld [vmem:[%s14 + $0x4] sm:$0xf]
        %v1349 = vunpack.c.l.b16 %v1345
        %v1350 = vunpack.c.l.b16 %v1346
        %v1351 = vpack.c.b16 %v1350, %v1349
        %1353 = vmatpush.bf16.msra.mxu0 0
        %1354 = vmatpush.bf16.msra.mxu0 0
        %1355 = vmatpush.bf16.msra.mxu0 0
        %1356 = vmatpush.bf16.msra.mxu0 0
        %1357 = vmatpush.bf16.msra.mxu0 0
        %1358 = vmatpush.bf16.msra.mxu0 0
        %1359 = vmatpush.bf16.msra.mxu0 0
        %1360 = vmatpush.bf16.msra.mxu0 %v1351
        %1361 = vmatmul.bf16.gmra.mxu0 %v662
        %v1362 = vpop.f32.mrf.mxu0
        %v1363 = vadd.f32 0.0, %v1362
        %v1364 = vpop.f32.mrf.mxu0
        %1365 = vdwg.mxu0
        %v1382 = vunpack.c.l.b16 %v1329
        %v1383 = vunpack.c.l.b16 %v1330
        %v1384 = vunpack.c.l.b16 %v1331
        %v1385 = vunpack.c.l.b16 %v1332
        %v1386 = vunpack.c.l.b16 %v1333
        %v1387 = vunpack.c.l.b16 %v1334
        %v1388 = vunpack.c.l.b16 %v1335
        %v1389 = vunpack.c.l.b16 %v1336
        %v1390 = vunpack.c.l.b16 %v1337
        %v1391 = vunpack.c.l.b16 %v1338
        %v1392 = vunpack.c.l.b16 %v1339
        %v1393 = vunpack.c.l.b16 %v1340
        %v1394 = vunpack.c.l.b16 %v1341
        %v1395 = vunpack.c.l.b16 %v1342
        %v1396 = vunpack.c.l.b16 %v1343
        %v1397 = vunpack.c.l.b16 %v1344
        %v1398 = vpack.c.b16 %v1383, %v1382
        %v1399 = vpack.c.b16 %v1385, %v1384
        %v1400 = vpack.c.b16 %v1387, %v1386
        %v1401 = vpack.c.b16 %v1389, %v1388
        %v1402 = vpack.c.b16 %v1391, %v1390
        %v1403 = vpack.c.b16 %v1393, %v1392
        %v1404 = vpack.c.b16 %v1395, %v1394
        %v1405 = vpack.c.b16 %v1397, %v1396
        %1414 = vmatpush.bf16.msra.mxu0 %v1405
        %1415 = vmatpush.bf16.msra.mxu0 %v1404
        %1416 = vmatpush.bf16.msra.mxu0 %v1403
        %1417 = vmatpush.bf16.msra.mxu0 %v1402
        %1418 = vmatpush.bf16.msra.mxu0 %v1401
        %1419 = vmatpush.bf16.msra.mxu0 %v1400
        %1420 = vmatpush.bf16.msra.mxu0 %v1399
        %1421 = vmatpush.bf16.msra.mxu0 %v1398
        %1422 = vmatmul.bf16.gmra.mxu0 %v1328
        %v1423 = vpop.f32.mrf.mxu0
        %v1424 = vadd.f32 %v1363, %v1423
        %v1425 = vpop.f32.mrf.mxu0
        %1426 = vdwg.mxu0
        %v1427 = vld [vmem:[#allocation12] sm:$0x1]
        %v1429 = vperm.slane %v1427, 0
        %v1431 = vadd.f32 %v1424, %v1429
        %v1432 = vmax.f32 %v1431, 0.0
        %1433 = vst [vmem:[%s622] sm:$0xff] %v1432
        %p1434 = scmp.lt.s32.totalorder %s31, 1
        %s1435 = scalar_select %p1434, %s31, 1
        %s1436 = smul.addr %s1435, 8
        %s1437 = scalar_lea.vmem %s16, %s1436
        // Predicated region
        $region113: #{evalue_network_forward.1} parent=83 // pred_check
          %p1438 = pneg %p390
        $region114: #{evalue_network_forward.1} parent=83 // pred_check_branch
          %1440 = sbr.rel (%p1438) target = $region116
        $region115: #{evalue_network_forward.1} parent=83 // pred_region
          _
        $region116: #{evalue_network_forward.1} parent=83 // pred_fallthru
          _
      $region84: #{evalue_network_forward.1} parent=5 // pred_fallthru
        _
      %p1441 = scmp.le.s32.totalorder 2, %s26
      // Predicated region
      $region117: #{evalue_network_forward.1} parent=5 // pred_check
        %p1442 = pneg %p1441
      $region118: #{evalue_network_forward.1} parent=5 // pred_check_branch
        %1444 = sbr.rel (%p1442) target = $region120
      $region119: #{evalue_network_forward.1} parent=5 // pred_region
        %s1445 = ssub.s32 %s26, 2
        // Predicated region
        $region121: #{evalue_network_forward.1} parent=119 // pred_check
          %p1446 = pneg %p396
        $region122: #{evalue_network_forward.1} parent=119 // pred_check_branch
          %1448 = sbr.rel (%p1446) target = $region124
        $region123: #{evalue_network_forward.1} parent=119 // pred_region
          %p1449 = scmp.lt.s32.totalorder %s32, 1
          %s1450 = scalar_select %p1449, %s32, 1
          %s1451 = smul.addr %s1450, 8
          %s1452 = scalar_lea.vmem %s16, %s1451
        $region124: #{evalue_network_forward.1} parent=119 // pred_fallthru
          _
      $region120: #{evalue_network_forward.1} parent=5 // pred_fallthru
        _
    $region6: #{evalue_network_forward.1} parent=1 // loop_footer
      %s30 = sadd.s32 1, %s26
    $region7: #{evalue_network_forward.1} parent=1 // loop_footer_branch
      %25 = sbr.rel target = $region3
    $region8: #{evalue_network_forward.1} parent=1 // loop_exit
      _
    %1453 = vsyncpa [#allocation3], 1
    %s1454 = scalar_lea.sflag [#allocation3], 1
    %1455 = vsyncpa %s1454, 1
    %1456 = vsyncpa [#allocation5], 1
    %1457 = vsyncpa [#allocation8], 1
    %1458 = vsyncpa [#allocation11], 1

</llo_original>
